<compile_context>
chip_gen: v7x
topology: tpu7x:2x2x1
jax: 0.10.0
libtpu: 0.0.40
codegen_flags: <defaults>
</compile_context>

<pallas_src>
import functools
from math import sqrt

import jax
import jax.numpy as jnp
from jax import lax
from jax.experimental import pallas as pl
from jax.experimental.pallas import tpu as pltpu


def mha_kernel(x_q_ref, x_kv_ref, wq_ref, bq_ref, wk_ref, bk_ref, wv_ref, bv_ref,
               wo_ref, bo_ref, o_ref, ctx_ref, *, nums_head, head_dim, norm_fact,
               kv_tile):
    # Kernel views (leading batch dim squeezed by pl.Squeezed()):
    #   x_q_ref : (TQ, D_in)  query rows for this grid step
    #   x_kv_ref: (S,  D_in)  full sequence (for K/V), constant across q-tiles
    #   o_ref   : (TQ, E)
    #   ctx_ref : (TQ, E) f32 VMEM scratch (head-concat slab)
    tq = x_q_ref.shape[0]
    s_total = x_kv_ref.shape[0]
    num_kv = s_total // kv_tile

    # ---- Q projection (bf16 operands, f32 accumulation); fold 1/sqrt(E) into Q.
    x_q = x_q_ref[...].astype(jnp.bfloat16)
    q = jnp.dot(x_q, wq_ref[...].astype(jnp.bfloat16),
                preferred_element_type=jnp.float32) + bq_ref[...]
    q = (q * norm_fact).astype(jnp.bfloat16)                        # (TQ, E)

    wk = wk_ref[...].astype(jnp.bfloat16)
    wv = wv_ref[...].astype(jnp.bfloat16)
    bk = bk_ref[...]
    bv = bv_ref[...]

    # ---- Flash-style online softmax over KV tiles (per-head running state).
    # TODO(synk): the module's optional `mask` argument is not wired in; it
    # would be applied to `s` inside this KV loop.
    m = [jnp.full((tq, 1), -jnp.inf, jnp.float32) for _ in range(nums_head)]
    l = [jnp.zeros((tq, 1), jnp.float32) for _ in range(nums_head)]
    acc = [jnp.zeros((tq, head_dim), jnp.float32) for _ in range(nums_head)]

    for kt in range(num_kv):
        x_kv = x_kv_ref[pl.ds(kt * kv_tile, kv_tile), :].astype(jnp.bfloat16)
        k = (jnp.dot(x_kv, wk, preferred_element_type=jnp.float32) + bk
             ).astype(jnp.bfloat16)                                  # (TK, E)
        v = (jnp.dot(x_kv, wv, preferred_element_type=jnp.float32) + bv
             ).astype(jnp.bfloat16)                                  # (TK, E)

        for h in range(nums_head):
            lo = h * head_dim
            q_h = q[:, lo:lo + head_dim]                             # (TQ, Hd)
            k_h = k[:, lo:lo + head_dim]                             # (TK, Hd)
            v_h = v[:, lo:lo + head_dim]                             # (TK, Hd)

            # scores = (Q / sqrt(E)) @ K^T, contracting the last dims directly
            # (no materialized transpose of K).
            s = lax.dot_general(q_h, k_h, (((1,), (1,)), ((), ())),
                                preferred_element_type=jnp.float32)  # (TQ, TK)

            m_new = jnp.maximum(m[h], jnp.max(s, axis=-1, keepdims=True))
            alpha = jnp.exp(m[h] - m_new)
            p = jnp.exp(s - m_new)                                   # (TQ, TK)
            l[h] = alpha * l[h] + jnp.sum(p, axis=-1, keepdims=True)
            acc[h] = alpha * acc[h] + jnp.dot(p.astype(jnp.bfloat16), v_h,
                                              preferred_element_type=jnp.float32)
            m[h] = m_new

    # ---- Finalize: normalize and write each head's context into the (TQ, E)
    # slab at its column offset (== transpose(1,2).contiguous().view concat).
    for h in range(nums_head):
        lo = h * head_dim
        ctx_ref[:, lo:lo + head_dim] = acc[h] * pl.reciprocal(l[h], approx=True)

    # ---- Output projection on the full (TQ, E) slab.
    out = jnp.dot(ctx_ref[...].astype(jnp.bfloat16),
                  wo_ref[...].astype(jnp.bfloat16),
                  preferred_element_type=jnp.float32) + bo_ref[...]
    o_ref[...] = out.astype(o_ref.dtype)


def _pick_tile(s, preferred=128):
    """Largest tile <= preferred that evenly divides s (falls back to full s)."""
    if s <= preferred:
        return s
    if s % preferred == 0:
        return preferred
    return s


def multi_head_attention(x, params, nums_head, *, q_tile=None, kv_tile=None):
    """x: (B, S, D_in) float32.  params: dict of weights/biases.  Returns (B, S, E)."""
    B, S, D_in = x.shape
    E = params["wq"].shape[1]
    assert E % nums_head == 0
    head_dim = E // nums_head
    norm_fact = 1.0 / sqrt(E)   # matches the PyTorch module's _norm_fact_

    q_tile = _pick_tile(S) if q_tile is None else q_tile
    kv_tile = _pick_tile(S) if kv_tile is None else kv_tile
    assert S % q_tile == 0 and S % kv_tile == 0
    num_q_tiles = S // q_tile

    kernel = functools.partial(
        mha_kernel, nums_head=nums_head, head_dim=head_dim,
        norm_fact=norm_fact, kv_tile=kv_tile)

    # Weights/biases: full-extent blocks with a constant index across the grid,
    # so the pipeliner keeps them resident (no per-step re-DMA).
    # TODO(synk): for very large D_in/E on v7x (64 MiB VMEM), tile the weight
    # blocks or single-buffer them (pipeline_mode=pl.Buffered(1)).
    w_in_spec = pl.BlockSpec((D_in, E), lambda b, qi: (0, 0))
    w_out_spec = pl.BlockSpec((E, E), lambda b, qi: (0, 0))
    b_spec = pl.BlockSpec((1, E), lambda b, qi: (0, 0))

    return pl.pallas_call(
        kernel,
        out_shape=jax.ShapeDtypeStruct((B, S, E), jnp.float32),
        grid_spec=pltpu.PrefetchScalarGridSpec(
            num_scalar_prefetch=0,
            grid=(B, num_q_tiles),
            in_specs=[
                # query rows for this (batch, q-tile) step
                pl.BlockSpec((pl.Squeezed(), q_tile, D_in),
                             lambda b, qi: (b, qi, 0)),
                # full sequence for K/V projection (constant across q-tiles)
                pl.BlockSpec((pl.Squeezed(), S, D_in),
                             lambda b, qi: (b, 0, 0)),
                w_in_spec, b_spec,      # q proj
                w_in_spec, b_spec,      # k proj
                w_in_spec, b_spec,      # v proj
                w_out_spec, b_spec,     # fc_out
            ],
            out_specs=pl.BlockSpec((pl.Squeezed(), q_tile, E),
                                   lambda b, qi: (b, qi, 0)),
            scratch_shapes=[pltpu.VMEM((q_tile, E), jnp.float32)],
        ),
        compiler_params=pltpu.CompilerParams(
            dimension_semantics=("parallel", "parallel"),
            vmem_limit_bytes=48 * 1024 * 1024),
    )(x, x, params["wq"], params["bq"], params["wk"], params["bk"],
      params["wv"], params["bv"], params["wo"], params["bo"])


def reference_mha(x, params, nums_head):
    """Pure-JAX (f32) reference mirroring the PyTorch forward exactly."""
    B, S, _ = x.shape
    E = params["wq"].shape[1]
    Hd = E // nums_head
    norm = 1.0 / sqrt(E)

    q = x @ params["wq"] + params["bq"]
    k = x @ params["wk"] + params["bk"]
    v = x @ params["wv"] + params["bv"]

    def split(t):  # (B,S,E) -> (B,H,S,Hd)
        return t.reshape(B, S, nums_head, Hd).transpose(0, 2, 1, 3)

    qh, kh, vh = split(q), split(k), split(v)
    scores = jnp.einsum("bhqd,bhkd->bhqk", qh, kh) * norm
    weights = jax.nn.softmax(scores, axis=-1)
    ctx = jnp.einsum("bhqk,bhkd->bhqd", weights, vh)          # (B,H,S,Hd)
    ctx = ctx.transpose(0, 2, 1, 3).reshape(B, S, E)
    return ctx @ params["wo"] + params["bo"]


if __name__ == "__main__":
    # Small shapes consistent with the module's forward.
    B, S, D_in = 2, 8, 16
    E, H = 32, 4

    key = jax.random.PRNGKey(0)
    keys = jax.random.split(key, 9)
    scale_in = 1.0 / sqrt(D_in)
    scale_e = 1.0 / sqrt(E)

    params = {
        "wq": jax.random.uniform(keys[0], (D_in, E), jnp.float32, -scale_in, scale_in),
        "bq": jax.random.uniform(keys[1], (1, E), jnp.float32, -scale_in, scale_in),
        "wk": jax.random.uniform(keys[2], (D_in, E), jnp.float32, -scale_in, scale_in),
        "bk": jax.random.uniform(keys[3], (1, E), jnp.float32, -scale_in, scale_in),
        "wv": jax.random.uniform(keys[4], (D_in, E), jnp.float32, -scale_in, scale_in),
        "bv": jax.random.uniform(keys[5], (1, E), jnp.float32, -scale_in, scale_in),
        "wo": jax.random.uniform(keys[6], (E, E), jnp.float32, -scale_e, scale_e),
        "bo": jax.random.uniform(keys[7], (1, E), jnp.float32, -scale_e, scale_e),
    }
    x = jax.random.normal(keys[8], (B, S, D_in), jnp.float32)

    out = multi_head_attention(x, params, nums_head=H)
    out = jax.block_until_ready(out)

    ref = reference_mha(x, params, nums_head=H)
    assert out.shape == (B, S, E)
    # bf16 MXU operands (f32 accumulation) + approx reciprocal -> looser tolerance
    # than a pure-f32 path, still tight for these magnitudes.
    assert jnp.allclose(out, ref, atol=2e-2, rtol=2e-2), "mismatch vs reference"

    # TODO(synk): the optional `mask` argument of the PyTorch forward is not
    # wired into the kernel (no mask used in this synthetic run).
    print("KERNEL_OK")
</pallas_src>

<mosaic_0001>
module attributes {stable_mosaic.version = 11 : i64} {
  func.func @mha_kernel(%arg0: i32, %arg1: i32, %arg2: memref<1x8x16xf32, #tpu.memory_space<vmem>>, %arg3: memref<1x8x16xf32, #tpu.memory_space<vmem>>, %arg4: memref<16x32xf32, #tpu.memory_space<vmem>>, %arg5: memref<1x32xf32, #tpu.memory_space<vmem>>, %arg6: memref<16x32xf32, #tpu.memory_space<vmem>>, %arg7: memref<1x32xf32, #tpu.memory_space<vmem>>, %arg8: memref<16x32xf32, #tpu.memory_space<vmem>>, %arg9: memref<1x32xf32, #tpu.memory_space<vmem>>, %arg10: memref<32x32xf32, #tpu.memory_space<vmem>>, %arg11: memref<1x32xf32, #tpu.memory_space<vmem>>, %arg12: memref<1x8x32xf32, #tpu.memory_space<vmem>>, %arg13: memref<8x32xf32, #tpu.memory_space<vmem>>) attributes {dimension_semantics = [#tpu.dimension_semantics<parallel>, #tpu.dimension_semantics<parallel>], iteration_bounds = array<i64: 2, 1>, scalar_prefetch = 0 : i64, scratch_operands = 1 : i64, tpu.core_type = #tpu.core_type<tc>, window_params = [{transform_indices = @transform_0, window_bounds = array<i64: 1, 8, 16>}, {transform_indices = @transform_1, window_bounds = array<i64: 1, 8, 16>}, {pipeline_mode = #tpu.pipeline_mode<synchronous>, transform_indices = @transform_2, window_bounds = array<i64: 16, 32>}, {pipeline_mode = #tpu.pipeline_mode<synchronous>, transform_indices = @transform_3, window_bounds = array<i64: 1, 32>}, {pipeline_mode = #tpu.pipeline_mode<synchronous>, transform_indices = @transform_4, window_bounds = array<i64: 16, 32>}, {pipeline_mode = #tpu.pipeline_mode<synchronous>, transform_indices = @transform_5, window_bounds = array<i64: 1, 32>}, {pipeline_mode = #tpu.pipeline_mode<synchronous>, transform_indices = @transform_6, window_bounds = array<i64: 16, 32>}, {pipeline_mode = #tpu.pipeline_mode<synchronous>, transform_indices = @transform_7, window_bounds = array<i64: 1, 32>}, {pipeline_mode = #tpu.pipeline_mode<synchronous>, transform_indices = @transform_8, window_bounds = array<i64: 32, 32>}, {pipeline_mode = #tpu.pipeline_mode<synchronous>, transform_indices = @transform_9, window_bounds = array<i64: 1, 32>}, {transform_indices = @transform_10, window_bounds = array<i64: 1, 8, 32>}]} {
    %c0 = arith.constant 0 : index
    %c0_0 = arith.constant 0 : index
    %c0_1 = arith.constant 0 : index
    %0 = vector.load %arg2[%c0, %c0_0, %c0_1] : memref<1x8x16xf32, #tpu.memory_space<vmem>>, vector<1x8x16xf32>
    %1 = vector.shape_cast %0 : vector<1x8x16xf32> to vector<8x16xf32>
    %2 = arith.truncf %1 : vector<8x16xf32> to vector<8x16xbf16>
    %c0_2 = arith.constant 0 : index
    %c0_3 = arith.constant 0 : index
    %3 = vector.load %arg4[%c0_2, %c0_3] : memref<16x32xf32, #tpu.memory_space<vmem>>, vector<16x32xf32>
    %4 = arith.truncf %3 : vector<16x32xf32> to vector<16x32xbf16>
    %cst = arith.constant dense<0.000000e+00> : vector<8x32xf32>
    %5 = tpu.matmul %2, %4, %cst {dimension_numbers = #tpu.dot_dimension_numbers<[1], [0], [0], [1], [0, 0, 1, 1], [], []>} : vector<8x16xbf16>, vector<16x32xbf16>, vector<8x32xf32> -> vector<8x32xf32>
    %c0_4 = arith.constant 0 : index
    %c0_5 = arith.constant 0 : index
    %6 = vector.load %arg5[%c0_4, %c0_5] : memref<1x32xf32, #tpu.memory_space<vmem>>, vector<1x32xf32>
    %7 = vector.broadcast %6 : vector<1x32xf32> to vector<8x32xf32>
    %8 = arith.addf %5, %7 : vector<8x32xf32>
    %cst_6 = arith.constant 0.176776692 : f32
    %9 = vector.broadcast %cst_6 : f32 to vector<8x32xf32>
    %10 = arith.mulf %8, %9 : vector<8x32xf32>
    %11 = arith.truncf %10 : vector<8x32xf32> to vector<8x32xbf16>
    %c0_7 = arith.constant 0 : index
    %c0_8 = arith.constant 0 : index
    %12 = vector.load %arg6[%c0_7, %c0_8] : memref<16x32xf32, #tpu.memory_space<vmem>>, vector<16x32xf32>
    %13 = arith.truncf %12 : vector<16x32xf32> to vector<16x32xbf16>
    %c0_9 = arith.constant 0 : index
    %c0_10 = arith.constant 0 : index
    %14 = vector.load %arg8[%c0_9, %c0_10] : memref<16x32xf32, #tpu.memory_space<vmem>>, vector<16x32xf32>
    %15 = arith.truncf %14 : vector<16x32xf32> to vector<16x32xbf16>
    %c0_11 = arith.constant 0 : index
    %c0_12 = arith.constant 0 : index
    %16 = vector.load %arg7[%c0_11, %c0_12] : memref<1x32xf32, #tpu.memory_space<vmem>>, vector<1x32xf32>
    %c0_13 = arith.constant 0 : index
    %c0_14 = arith.constant 0 : index
    %17 = vector.load %arg9[%c0_13, %c0_14] : memref<1x32xf32, #tpu.memory_space<vmem>>, vector<1x32xf32>
    %cst_15 = arith.constant 0xFF800000 : f32
    %18 = vector.broadcast %cst_15 : f32 to vector<8x1xf32>
    %cst_16 = arith.constant 0xFF800000 : f32
    %19 = vector.broadcast %cst_16 : f32 to vector<8x1xf32>
    %cst_17 = arith.constant 0xFF800000 : f32
    %20 = vector.broadcast %cst_17 : f32 to vector<8x1xf32>
    %cst_18 = arith.constant 0xFF800000 : f32
    %21 = vector.broadcast %cst_18 : f32 to vector<8x1xf32>
    %cst_19 = arith.constant 0.000000e+00 : f32
    %22 = vector.broadcast %cst_19 : f32 to vector<8x1xf32>
    %cst_20 = arith.constant 0.000000e+00 : f32
    %23 = vector.broadcast %cst_20 : f32 to vector<8x1xf32>
    %cst_21 = arith.constant 0.000000e+00 : f32
    %24 = vector.broadcast %cst_21 : f32 to vector<8x1xf32>
    %cst_22 = arith.constant 0.000000e+00 : f32
    %25 = vector.broadcast %cst_22 : f32 to vector<8x1xf32>
    %cst_23 = arith.constant 0.000000e+00 : f32
    %26 = vector.broadcast %cst_23 : f32 to vector<8x8xf32>
    %cst_24 = arith.constant 0.000000e+00 : f32
    %27 = vector.broadcast %cst_24 : f32 to vector<8x8xf32>
    %cst_25 = arith.constant 0.000000e+00 : f32
    %28 = vector.broadcast %cst_25 : f32 to vector<8x8xf32>
    %cst_26 = arith.constant 0.000000e+00 : f32
    %29 = vector.broadcast %cst_26 : f32 to vector<8x8xf32>
    %c0_27 = arith.constant 0 : index
    %c0_28 = arith.constant 0 : index
    %c0_29 = arith.constant 0 : index
    %30 = vector.load %arg3[%c0_27, %c0_28, %c0_29] : memref<1x8x16xf32, #tpu.memory_space<vmem>>, vector<1x8x16xf32>
    %31 = vector.shape_cast %30 : vector<1x8x16xf32> to vector<8x16xf32>
    %32 = arith.truncf %31 : vector<8x16xf32> to vector<8x16xbf16>
    %cst_30 = arith.constant dense<0.000000e+00> : vector<8x32xf32>
    %33 = tpu.matmul %32, %13, %cst_30 {dimension_numbers = #tpu.dot_dimension_numbers<[1], [0], [0], [1], [0, 0, 1, 1], [], []>} : vector<8x16xbf16>, vector<16x32xbf16>, vector<8x32xf32> -> vector<8x32xf32>
    %34 = vector.broadcast %16 : vector<1x32xf32> to vector<8x32xf32>
    %35 = arith.addf %33, %34 : vector<8x32xf32>
    %36 = arith.truncf %35 : vector<8x32xf32> to vector<8x32xbf16>
    %cst_31 = arith.constant dense<0.000000e+00> : vector<8x32xf32>
    %37 = tpu.matmul %32, %15, %cst_31 {dimension_numbers = #tpu.dot_dimension_numbers<[1], [0], [0], [1], [0, 0, 1, 1], [], []>} : vector<8x16xbf16>, vector<16x32xbf16>, vector<8x32xf32> -> vector<8x32xf32>
    %38 = vector.broadcast %17 : vector<1x32xf32> to vector<8x32xf32>
    %39 = arith.addf %37, %38 : vector<8x32xf32>
    %40 = arith.truncf %39 : vector<8x32xf32> to vector<8x32xbf16>
    %41 = vector.extract_strided_slice %11 {offsets = [0, 0], sizes = [8, 8], strides = [1, 1]} : vector<8x32xbf16> to vector<8x8xbf16>
    %42 = vector.extract_strided_slice %36 {offsets = [0, 0], sizes = [8, 8], strides = [1, 1]} : vector<8x32xbf16> to vector<8x8xbf16>
    %43 = vector.extract_strided_slice %40 {offsets = [0, 0], sizes = [8, 8], strides = [1, 1]} : vector<8x32xbf16> to vector<8x8xbf16>
    %cst_32 = arith.constant dense<0.000000e+00> : vector<8x8xf32>
    %44 = tpu.matmul %41, %42, %cst_32 {dimension_numbers = #tpu.dot_dimension_numbers<[1], [1], [0], [0], [0, 0, 1, 0], [], []>} : vector<8x8xbf16>, vector<8x8xbf16>, vector<8x8xf32> -> vector<8x8xf32>
    %cst_33 = arith.constant dense<0xFF800000> : vector<8xf32>
    %45 = vector.multi_reduction <maximumf>, %44, %cst_33 [1] : vector<8x8xf32> to vector<8xf32>
    %46 = vector.shape_cast %45 : vector<8xf32> to vector<8x1xf32>
    %47 = arith.maximumf %18, %46 : vector<8x1xf32>
    %48 = arith.subf %18, %47 : vector<8x1xf32>
    %49 = math.exp %48 : vector<8x1xf32>
    %50 = vector.broadcast %47 : vector<8x1xf32> to vector<8x8xf32>
    %51 = arith.subf %44, %50 : vector<8x8xf32>
    %52 = math.exp %51 : vector<8x8xf32>
    %53 = arith.mulf %49, %22 : vector<8x1xf32>
    %cst_34 = arith.constant dense<0.000000e+00> : vector<8xf32>
    %54 = vector.multi_reduction <add>, %52, %cst_34 [1] : vector<8x8xf32> to vector<8xf32>
    %55 = vector.shape_cast %54 : vector<8xf32> to vector<8x1xf32>
    %56 = arith.addf %53, %55 : vector<8x1xf32>
    %57 = vector.broadcast %49 : vector<8x1xf32> to vector<8x8xf32>
    %58 = arith.mulf %57, %26 : vector<8x8xf32>
    %59 = arith.truncf %52 : vector<8x8xf32> to vector<8x8xbf16>
    %cst_35 = arith.constant dense<0.000000e+00> : vector<8x8xf32>
    %60 = tpu.matmul %59, %43, %cst_35 {dimension_numbers = #tpu.dot_dimension_numbers<[1], [0], [0], [1], [0, 0, 1, 1], [], []>} : vector<8x8xbf16>, vector<8x8xbf16>, vector<8x8xf32> -> vector<8x8xf32>
    %61 = arith.addf %58, %60 : vector<8x8xf32>
    %62 = vector.extract_strided_slice %11 {offsets = [0, 8], sizes = [8, 8], strides = [1, 1]} : vector<8x32xbf16> to vector<8x8xbf16>
    %63 = vector.extract_strided_slice %36 {offsets = [0, 8], sizes = [8, 8], strides = [1, 1]} : vector<8x32xbf16> to vector<8x8xbf16>
    %64 = vector.extract_strided_slice %40 {offsets = [0, 8], sizes = [8, 8], strides = [1, 1]} : vector<8x32xbf16> to vector<8x8xbf16>
    %cst_36 = arith.constant dense<0.000000e+00> : vector<8x8xf32>
    %65 = tpu.matmul %62, %63, %cst_36 {dimension_numbers = #tpu.dot_dimension_numbers<[1], [1], [0], [0], [0, 0, 1, 0], [], []>} : vector<8x8xbf16>, vector<8x8xbf16>, vector<8x8xf32> -> vector<8x8xf32>
    %cst_37 = arith.constant dense<0xFF800000> : vector<8xf32>
    %66 = vector.multi_reduction <maximumf>, %65, %cst_37 [1] : vector<8x8xf32> to vector<8xf32>
    %67 = vector.shape_cast %66 : vector<8xf32> to vector<8x1xf32>
    %68 = arith.maximumf %19, %67 : vector<8x1xf32>
    %69 = arith.subf %19, %68 : vector<8x1xf32>
    %70 = math.exp %69 : vector<8x1xf32>
    %71 = vector.broadcast %68 : vector<8x1xf32> to vector<8x8xf32>
    %72 = arith.subf %65, %71 : vector<8x8xf32>
    %73 = math.exp %72 : vector<8x8xf32>
    %74 = arith.mulf %70, %23 : vector<8x1xf32>
    %cst_38 = arith.constant dense<0.000000e+00> : vector<8xf32>
    %75 = vector.multi_reduction <add>, %73, %cst_38 [1] : vector<8x8xf32> to vector<8xf32>
    %76 = vector.shape_cast %75 : vector<8xf32> to vector<8x1xf32>
    %77 = arith.addf %74, %76 : vector<8x1xf32>
    %78 = vector.broadcast %70 : vector<8x1xf32> to vector<8x8xf32>
    %79 = arith.mulf %78, %27 : vector<8x8xf32>
    %80 = arith.truncf %73 : vector<8x8xf32> to vector<8x8xbf16>
    %cst_39 = arith.constant dense<0.000000e+00> : vector<8x8xf32>
    %81 = tpu.matmul %80, %64, %cst_39 {dimension_numbers = #tpu.dot_dimension_numbers<[1], [0], [0], [1], [0, 0, 1, 1], [], []>} : vector<8x8xbf16>, vector<8x8xbf16>, vector<8x8xf32> -> vector<8x8xf32>
    %82 = arith.addf %79, %81 : vector<8x8xf32>
    %83 = vector.extract_strided_slice %11 {offsets = [0, 16], sizes = [8, 8], strides = [1, 1]} : vector<8x32xbf16> to vector<8x8xbf16>
    %84 = vector.extract_strided_slice %36 {offsets = [0, 16], sizes = [8, 8], strides = [1, 1]} : vector<8x32xbf16> to vector<8x8xbf16>
    %85 = vector.extract_strided_slice %40 {offsets = [0, 16], sizes = [8, 8], strides = [1, 1]} : vector<8x32xbf16> to vector<8x8xbf16>
    %cst_40 = arith.constant dense<0.000000e+00> : vector<8x8xf32>
    %86 = tpu.matmul %83, %84, %cst_40 {dimension_numbers = #tpu.dot_dimension_numbers<[1], [1], [0], [0], [0, 0, 1, 0], [], []>} : vector<8x8xbf16>, vector<8x8xbf16>, vector<8x8xf32> -> vector<8x8xf32>
    %cst_41 = arith.constant dense<0xFF800000> : vector<8xf32>
    %87 = vector.multi_reduction <maximumf>, %86, %cst_41 [1] : vector<8x8xf32> to vector<8xf32>
    %88 = vector.shape_cast %87 : vector<8xf32> to vector<8x1xf32>
    %89 = arith.maximumf %20, %88 : vector<8x1xf32>
    %90 = arith.subf %20, %89 : vector<8x1xf32>
    %91 = math.exp %90 : vector<8x1xf32>
    %92 = vector.broadcast %89 : vector<8x1xf32> to vector<8x8xf32>
    %93 = arith.subf %86, %92 : vector<8x8xf32>
    %94 = math.exp %93 : vector<8x8xf32>
    %95 = arith.mulf %91, %24 : vector<8x1xf32>
    %cst_42 = arith.constant dense<0.000000e+00> : vector<8xf32>
    %96 = vector.multi_reduction <add>, %94, %cst_42 [1] : vector<8x8xf32> to vector<8xf32>
    %97 = vector.shape_cast %96 : vector<8xf32> to vector<8x1xf32>
    %98 = arith.addf %95, %97 : vector<8x1xf32>
    %99 = vector.broadcast %91 : vector<8x1xf32> to vector<8x8xf32>
    %100 = arith.mulf %99, %28 : vector<8x8xf32>
    %101 = arith.truncf %94 : vector<8x8xf32> to vector<8x8xbf16>
    %cst_43 = arith.constant dense<0.000000e+00> : vector<8x8xf32>
    %102 = tpu.matmul %101, %85, %cst_43 {dimension_numbers = #tpu.dot_dimension_numbers<[1], [0], [0], [1], [0, 0, 1, 1], [], []>} : vector<8x8xbf16>, vector<8x8xbf16>, vector<8x8xf32> -> vector<8x8xf32>
    %103 = arith.addf %100, %102 : vector<8x8xf32>
    %104 = vector.extract_strided_slice %11 {offsets = [0, 24], sizes = [8, 8], strides = [1, 1]} : vector<8x32xbf16> to vector<8x8xbf16>
    %105 = vector.extract_strided_slice %36 {offsets = [0, 24], sizes = [8, 8], strides = [1, 1]} : vector<8x32xbf16> to vector<8x8xbf16>
    %106 = vector.extract_strided_slice %40 {offsets = [0, 24], sizes = [8, 8], strides = [1, 1]} : vector<8x32xbf16> to vector<8x8xbf16>
    %cst_44 = arith.constant dense<0.000000e+00> : vector<8x8xf32>
    %107 = tpu.matmul %104, %105, %cst_44 {dimension_numbers = #tpu.dot_dimension_numbers<[1], [1], [0], [0], [0, 0, 1, 0], [], []>} : vector<8x8xbf16>, vector<8x8xbf16>, vector<8x8xf32> -> vector<8x8xf32>
    %cst_45 = arith.constant dense<0xFF800000> : vector<8xf32>
    %108 = vector.multi_reduction <maximumf>, %107, %cst_45 [1] : vector<8x8xf32> to vector<8xf32>
    %109 = vector.shape_cast %108 : vector<8xf32> to vector<8x1xf32>
    %110 = arith.maximumf %21, %109 : vector<8x1xf32>
    %111 = arith.subf %21, %110 : vector<8x1xf32>
    %112 = math.exp %111 : vector<8x1xf32>
    %113 = vector.broadcast %110 : vector<8x1xf32> to vector<8x8xf32>
    %114 = arith.subf %107, %113 : vector<8x8xf32>
    %115 = math.exp %114 : vector<8x8xf32>
    %116 = arith.mulf %112, %25 : vector<8x1xf32>
    %cst_46 = arith.constant dense<0.000000e+00> : vector<8xf32>
    %117 = vector.multi_reduction <add>, %115, %cst_46 [1] : vector<8x8xf32> to vector<8xf32>
    %118 = vector.shape_cast %117 : vector<8xf32> to vector<8x1xf32>
    %119 = arith.addf %116, %118 : vector<8x1xf32>
    %120 = vector.broadcast %112 : vector<8x1xf32> to vector<8x8xf32>
    %121 = arith.mulf %120, %29 : vector<8x8xf32>
    %122 = arith.truncf %115 : vector<8x8xf32> to vector<8x8xbf16>
    %cst_47 = arith.constant dense<0.000000e+00> : vector<8x8xf32>
    %123 = tpu.matmul %122, %106, %cst_47 {dimension_numbers = #tpu.dot_dimension_numbers<[1], [0], [0], [1], [0, 0, 1, 1], [], []>} : vector<8x8xbf16>, vector<8x8xbf16>, vector<8x8xf32> -> vector<8x8xf32>
    %124 = arith.addf %121, %123 : vector<8x8xf32>
    %125 = tpu.reciprocal %56 {approx = true} : vector<8x1xf32> -> vector<8x1xf32>
    %126 = vector.broadcast %125 : vector<8x1xf32> to vector<8x8xf32>
    %127 = arith.mulf %61, %126 : vector<8x8xf32>
    %c0_48 = arith.constant 0 : index
    %c0_49 = arith.constant 0 : index
    %128 = vector.load %arg13[%c0_48, %c0_49] : memref<8x32xf32, #tpu.memory_space<vmem>>, vector<8x8xf32>
    tpu.vector_store %arg13[%c0_48, %c0_49], %127 {strides = array<i32>} : memref<8x32xf32, #tpu.memory_space<vmem>>, vector<8x8xf32>,
    %129 = tpu.reciprocal %77 {approx = true} : vector<8x1xf32> -> vector<8x1xf32>
    %130 = vector.broadcast %129 : vector<8x1xf32> to vector<8x8xf32>
    %131 = arith.mulf %82, %130 : vector<8x8xf32>
    %c0_50 = arith.constant 0 : index
    %c8 = arith.constant 8 : index
    %132 = vector.load %arg13[%c0_50, %c8] : memref<8x32xf32, #tpu.memory_space<vmem>>, vector<8x8xf32>
    tpu.vector_store %arg13[%c0_50, %c8], %131 {strides = array<i32>} : memref<8x32xf32, #tpu.memory_space<vmem>>, vector<8x8xf32>,
    %133 = tpu.reciprocal %98 {approx = true} : vector<8x1xf32> -> vector<8x1xf32>
    %134 = vector.broadcast %133 : vector<8x1xf32> to vector<8x8xf32>
    %135 = arith.mulf %103, %134 : vector<8x8xf32>
    %c0_51 = arith.constant 0 : index
    %c16 = arith.constant 16 : index
    %136 = vector.load %arg13[%c0_51, %c16] : memref<8x32xf32, #tpu.memory_space<vmem>>, vector<8x8xf32>
    tpu.vector_store %arg13[%c0_51, %c16], %135 {strides = array<i32>} : memref<8x32xf32, #tpu.memory_space<vmem>>, vector<8x8xf32>,
    %137 = tpu.reciprocal %119 {approx = true} : vector<8x1xf32> -> vector<8x1xf32>
    %138 = vector.broadcast %137 : vector<8x1xf32> to vector<8x8xf32>
    %139 = arith.mulf %124, %138 : vector<8x8xf32>
    %c0_52 = arith.constant 0 : index
    %c24 = arith.constant 24 : index
    %140 = vector.load %arg13[%c0_52, %c24] : memref<8x32xf32, #tpu.memory_space<vmem>>, vector<8x8xf32>
    tpu.vector_store %arg13[%c0_52, %c24], %139 {strides = array<i32>} : memref<8x32xf32, #tpu.memory_space<vmem>>, vector<8x8xf32>,
    %c0_53 = arith.constant 0 : index
    %c0_54 = arith.constant 0 : index
    %141 = vector.load %arg13[%c0_53, %c0_54] : memref<8x32xf32, #tpu.memory_space<vmem>>, vector<8x32xf32>
    %142 = arith.truncf %141 : vector<8x32xf32> to vector<8x32xbf16>
    %c0_55 = arith.constant 0 : index
    %c0_56 = arith.constant 0 : index
    %143 = vector.load %arg10[%c0_55, %c0_56] : memref<32x32xf32, #tpu.memory_space<vmem>>, vector<32x32xf32>
    %144 = arith.truncf %143 : vector<32x32xf32> to vector<32x32xbf16>
    %cst_57 = arith.constant dense<0.000000e+00> : vector<8x32xf32>
    %145 = tpu.matmul %142, %144, %cst_57 {dimension_numbers = #tpu.dot_dimension_numbers<[1], [0], [0], [1], [0, 0, 1, 1], [], []>} : vector<8x32xbf16>, vector<32x32xbf16>, vector<8x32xf32> -> vector<8x32xf32>
    %c0_58 = arith.constant 0 : index
    %c0_59 = arith.constant 0 : index
    %146 = vector.load %arg11[%c0_58, %c0_59] : memref<1x32xf32, #tpu.memory_space<vmem>>, vector<1x32xf32>
    %147 = vector.broadcast %146 : vector<1x32xf32> to vector<8x32xf32>
    %148 = arith.addf %145, %147 : vector<8x32xf32>
    %c0_60 = arith.constant 0 : index
    %c0_61 = arith.constant 0 : index
    %c0_62 = arith.constant 0 : index
    %149 = vector.load %arg12[%c0_60, %c0_61, %c0_62] : memref<1x8x32xf32, #tpu.memory_space<vmem>>, vector<1x8x32xf32>
    %150 = vector.shape_cast %149 : vector<1x8x32xf32> to vector<8x32xf32>
    %151 = vector.shape_cast %148 : vector<8x32xf32> to vector<1x8x32xf32>
    tpu.vector_store %arg12[%c0_60, %c0_61, %c0_62], %151 {strides = array<i32>} : memref<1x8x32xf32, #tpu.memory_space<vmem>>, vector<1x8x32xf32>,
    return
  }
  func.func @transform_0(%arg0: i32, %arg1: i32) -> (i32, i32, i32) {
    %c0_i32 = arith.constant 0 : i32
    %c0_i32_0 = arith.constant 0 : i32
    return %arg0, %arg1, %c0_i32 : i32, i32, i32
  }
  func.func @transform_1(%arg0: i32, %arg1: i32) -> (i32, i32, i32) {
    %c0_i32 = arith.constant 0 : i32
    %c0_i32_0 = arith.constant 0 : i32
    %c0_i32_1 = arith.constant 0 : i32
    return %arg0, %c0_i32, %c0_i32_0 : i32, i32, i32
  }
  func.func @transform_2(%arg0: i32, %arg1: i32) -> (i32, i32) {
    %c0_i32 = arith.constant 0 : i32
    %c0_i32_0 = arith.constant 0 : i32
    %c0_i32_1 = arith.constant 0 : i32
    return %c0_i32, %c0_i32_0 : i32, i32
  }
  func.func @transform_3(%arg0: i32, %arg1: i32) -> (i32, i32) {
    %c0_i32 = arith.constant 0 : i32
    %c0_i32_0 = arith.constant 0 : i32
    %c0_i32_1 = arith.constant 0 : i32
    return %c0_i32, %c0_i32_0 : i32, i32
  }
  func.func @transform_4(%arg0: i32, %arg1: i32) -> (i32, i32) {
    %c0_i32 = arith.constant 0 : i32
    %c0_i32_0 = arith.constant 0 : i32
    %c0_i32_1 = arith.constant 0 : i32
    return %c0_i32, %c0_i32_0 : i32, i32
  }
  func.func @transform_5(%arg0: i32, %arg1: i32) -> (i32, i32) {
    %c0_i32 = arith.constant 0 : i32
    %c0_i32_0 = arith.constant 0 : i32
    %c0_i32_1 = arith.constant 0 : i32
    return %c0_i32, %c0_i32_0 : i32, i32
  }
  func.func @transform_6(%arg0: i32, %arg1: i32) -> (i32, i32) {
    %c0_i32 = arith.constant 0 : i32
    %c0_i32_0 = arith.constant 0 : i32
    %c0_i32_1 = arith.constant 0 : i32
    return %c0_i32, %c0_i32_0 : i32, i32
  }
  func.func @transform_7(%arg0: i32, %arg1: i32) -> (i32, i32) {
    %c0_i32 = arith.constant 0 : i32
    %c0_i32_0 = arith.constant 0 : i32
    %c0_i32_1 = arith.constant 0 : i32
    return %c0_i32, %c0_i32_0 : i32, i32
  }
  func.func @transform_8(%arg0: i32, %arg1: i32) -> (i32, i32) {
    %c0_i32 = arith.constant 0 : i32
    %c0_i32_0 = arith.constant 0 : i32
    %c0_i32_1 = arith.constant 0 : i32
    return %c0_i32, %c0_i32_0 : i32, i32
  }
  func.func @transform_9(%arg0: i32, %arg1: i32) -> (i32, i32) {
    %c0_i32 = arith.constant 0 : i32
    %c0_i32_0 = arith.constant 0 : i32
    %c0_i32_1 = arith.constant 0 : i32
    return %c0_i32, %c0_i32_0 : i32, i32
  }
  func.func @transform_10(%arg0: i32, %arg1: i32) -> (i32, i32, i32) {
    %c0_i32 = arith.constant 0 : i32
    %c0_i32_0 = arith.constant 0 : i32
    return %arg0, %arg1, %c0_i32 : i32, i32, i32
  }
}

</mosaic_0001>

<llo_original>
// kernel: tpu_custom_call.1
$region0: #{tpu_custom_call.1}
  #allocation0 [shape = 'u32[]', space=smem, size = 0x4, offset = 0x4, fixed_abs, tag = 'smem constant byte address 0x4 - core index']
  #allocation1 [shape = 'u32[144,128]{1,0:T(1,128)}', space=vmem, size = 0x12000, scoped, tag = 'internal scratch']
  #allocation2 [shape = 'f32[8,32]{1,0:T(8,128)}', space=vmem, size = 0x1000, scoped, tag = 'scratch operand']
  %s0 = inlined_call_operand.hbm [shape: f32[2,8,16], index: 0, kind: input, shape index: {}]
  %s1 = inlined_call_operand.hbm [shape: f32[2,8,16], index: 1, kind: input, shape index: {}]
  %s2 = inlined_call_operand.hbm [shape: f32[16,32], index: 2, kind: input, shape index: {}]
  %s3 = inlined_call_operand.vmem [shape: f32[1,32], index: 3, kind: input, shape index: {}]
  %s4 = inlined_call_operand.hbm [shape: f32[16,32], index: 4, kind: input, shape index: {}]
  %s5 = inlined_call_operand.vmem [shape: f32[1,32], index: 5, kind: input, shape index: {}]
  %s6 = inlined_call_operand.vmem [shape: f32[16,32], index: 6, kind: input, shape index: {}]
  %s7 = inlined_call_operand.vmem [shape: f32[1,32], index: 7, kind: input, shape index: {}]
  %s8 = inlined_call_operand.hbm [shape: f32[32,32], index: 8, kind: input, shape index: {}]
  %s9 = inlined_call_operand.vmem [shape: f32[1,32], index: 9, kind: input, shape index: {}]
  %s10 = inlined_call_operand.hbm [shape: f32[2,8,32], index: 10, kind: output, shape index: {}]
  %s11 = sld [smem:[#allocation0]]
  $region93: #{tpu_custom_call.1} parent=0
    _
  %s13 = ssub.s32 1, %s11
  %s14 = scalar_select 0, %s13, %s11
  $region1: #{tpu_custom_call.1} parent=0
    #allocation3 [shape = 'u8[8192]{0}', space=vmem, size = 0x2000, scoped, tag = 'input window, operand 0']
    #allocation4 [shape = 's32[2]{0}', space=sflag, size = 0x8, scoped, tag = 'scoped memory for tpu_custom_call.1']
    #allocation5 [shape = 's32[2]{0}', space=sflag, size = 0x8, scoped, tag = 'scoped memory for tpu_custom_call.1']
    #allocation6 [shape = 'u8[8192]{0}', space=vmem, size = 0x2000, scoped, tag = 'input window, operand 1']
    #allocation7 [shape = 's32[2]{0}', space=sflag, size = 0x8, scoped, tag = 'scoped memory for tpu_custom_call.1']
    #allocation8 [shape = 'u8[8192]{0}', space=vmem, size = 0x2000, scoped, tag = 'input window, operand 2, single buffered']
    #allocation9 [shape = 'u8[8192]{0}', space=vmem, size = 0x2000, scoped, tag = 'input window, operand 4, single buffered']
    #allocation10 [shape = 's32[1]{0}', space=sflag, size = 0x4, scoped, tag = 'scoped memory for tpu_custom_call.1']
    #allocation11 [shape = 'u8[16384]{0}', space=vmem, size = 0x4000, scoped, tag = 'input window, operand 8, single buffered']
    #allocation12 [shape = 'u8[8192]{0}', space=vmem, size = 0x2000, scoped, tag = 'output window, operand 0']
    %15 = vsyncpa [#allocation4], 0
    %s16 = scalar_lea.sflag [#allocation4], 1
    %17 = vsyncpa %s16, 0
    %18 = vsyncpa [#allocation7], 0
    %s19 = scalar_lea.sflag [#allocation7], 1
    %20 = vsyncpa %s19, 0
    %21 = vsyncpa [#allocation10], 0
    %22 = vsyncpa [#allocation5], 0
    %s23 = scalar_lea.sflag [#allocation5], 1
    %24 = vsyncpa %s23, 0
    loop: start=0, step=1, limit=4
    $region2: #{tpu_custom_call.1} parent=1 // loop_pre_header
      _
    $region3: #{tpu_custom_call.1} parent=1 // loop_header
      %s26 = sphi 0, %s30
      %p27 = scmp.ge.s32.totalorder %s26, 4
      %s33 = sphi 0, %s45
      %s34 = sphi 0, %s41
      %s35 = sphi 0, %s33
      %s36 = sphi 0, %s34
      %s37 = sphi 0, %s35
      %s38 = sphi 0, %s36
      %s50 = sphi 0, %s52
      %s53 = sphi 0, %s50
      %s54 = sphi 0, %s53
      %s70 = sphi 0, %s54
      %s76 = sphi 0, %s78
      %s79 = sphi 0, %s76
      %s80 = sphi 0, %s79
      %s96 = sphi 0, %s80
      %s100 = sphi 0, %s100
      %s102 = sphi 0, %s100
      %s103 = sphi 0, %s102
      %s117 = sphi 0, %s103
      %s121 = sphi 0, %s121
      %s123 = sphi 0, %s121
      %s124 = sphi 0, %s123
      %s138 = sphi 0, %s124
      %s142 = sphi 0, %s142
      %s144 = sphi 0, %s142
      %s145 = sphi 0, %s144
      %s159 = sphi 0, %s145
      %s163 = sphi 0, %s163
      %s165 = sphi 0, %s163
      %s166 = sphi 0, %s165
      %s180 = sphi 0, %s166
      %s184 = sphi 0, %s184
      %s186 = sphi 0, %s184
      %s187 = sphi 0, %s186
      %s201 = sphi 0, %s187
      %s205 = sphi 0, %s205
      %s207 = sphi 0, %s205
      %s208 = sphi 0, %s207
      %s222 = sphi 0, %s208
      %s226 = sphi 0, %s226
      %s228 = sphi 0, %s226
      %s229 = sphi 0, %s228
      %s243 = sphi 0, %s229
      %s247 = sphi 0, %s247
      %s249 = sphi 0, %s247
      %s250 = sphi 0, %s249
      %s264 = sphi 0, %s250
      %s272 = sphi 0, %s274
      %s275 = sphi 0, %s272
      %s276 = sphi 0, %s275
      %s292 = sphi 0, %s276
    $region4: #{tpu_custom_call.1} parent=1 // loop_header_branch
      %29 = sbr.rel (%p27) target = $region8
    $region5: #{tpu_custom_call.1} parent=1 // loop_body
      %s31 = ssub.s32 %s26, 1
      %s32 = ssub.s32 %s26, 2
      %s39 = sadd.s32 1, %s34
      %p40 = scmp.ge.s32.totalorder %s39, 1
      %s41 = scalar_select %p40, 0, %s39
      %s42 = sadd.s32 1, %s33
      %s43 = scalar_select %p40, %s42, %s33
      %p44 = scmp.ge.s32.totalorder %s43, 2
      %s45 = scalar_select %p44, 0, %s43
      %s46 = ssub.s32 %s33, %s45
      %s47 = ssub.s32 %s34, %s41
      %s48 = sor.u32 %s46, %s47
      %p49 = scmp.eq.s32.totalorder %s48, 0
      %s51 = sadd.s32 %s50, 1
      %s52 = scalar_select %p49, %s50, %s51
      %p55 = pneg %p49
      %p56 = scmp.eq.s32.totalorder %s26, 1
      %p57 = por %p55, %p56
      %p58 = scmp.ne.s32.totalorder %s50, %s53
      %p59 = scmp.eq.s32.totalorder %s26, 0
      %p60 = por %p58, %p59
      %p61 = scmp.ne.s32.totalorder %s50, %s53
      %p62 = scmp.eq.s32.totalorder %s31, 1
      %p63 = por %p61, %p62
      %p64 = scmp.ne.s32.totalorder %s53, %s54
      %p65 = scmp.eq.s32.totalorder %s31, 0
      %p66 = por %p64, %p65
      %p67 = scmp.ne.s32.totalorder %s53, %s54
      %p68 = scmp.eq.s32.totalorder %s32, 1
      %p69 = por %p67, %p68
      %p71 = scmp.ne.s32.totalorder %s54, %s70
      %p72 = scmp.eq.s32.totalorder %s32, 0
      %p73 = por %p71, %p72
      %s74 = ssub.s32 %s33, %s45
      %p75 = scmp.eq.s32.totalorder %s74, 0
      %s77 = sadd.s32 %s76, 1
      %s78 = scalar_select %p75, %s76, %s77
      %p81 = pneg %p75
      %p82 = scmp.eq.s32.totalorder %s26, 1
      %p83 = por %p81, %p82
      %p84 = scmp.ne.s32.totalorder %s76, %s79
      %p85 = scmp.eq.s32.totalorder %s26, 0
      %p86 = por %p84, %p85
      %p87 = scmp.ne.s32.totalorder %s76, %s79
      %p88 = scmp.eq.s32.totalorder %s31, 1
      %p89 = por %p87, %p88
      %p90 = scmp.ne.s32.totalorder %s79, %s80
      %p91 = scmp.eq.s32.totalorder %s31, 0
      %p92 = por %p90, %p91
      %p93 = scmp.ne.s32.totalorder %s79, %s80
      %p94 = scmp.eq.s32.totalorder %s32, 1
      %p95 = por %p93, %p94
      %p97 = scmp.ne.s32.totalorder %s80, %s96
      %p98 = scmp.eq.s32.totalorder %s32, 0
      %p99 = por %p97, %p98
      %s101 = sadd.s32 %s100, 1
      %p104 = scmp.eq.s32.totalorder %s26, 1
      %p105 = scmp.ne.s32.totalorder %s100, %s102
      %p106 = scmp.eq.s32.totalorder %s26, 0
      %p107 = por %p105, %p106
      %p108 = scmp.ne.s32.totalorder %s100, %s102
      %p109 = scmp.eq.s32.totalorder %s31, 1
      %p110 = por %p108, %p109
      %p111 = scmp.ne.s32.totalorder %s102, %s103
      %p112 = scmp.eq.s32.totalorder %s31, 0
      %p113 = por %p111, %p112
      %p114 = scmp.ne.s32.totalorder %s102, %s103
      %p115 = scmp.eq.s32.totalorder %s32, 1
      %p116 = por %p114, %p115
      %p118 = scmp.ne.s32.totalorder %s103, %s117
      %p119 = scmp.eq.s32.totalorder %s32, 0
      %p120 = por %p118, %p119
      %s122 = sadd.s32 %s121, 1
      %p125 = scmp.eq.s32.totalorder %s26, 1
      %p126 = scmp.ne.s32.totalorder %s121, %s123
      %p127 = scmp.eq.s32.totalorder %s26, 0
      %p128 = por %p126, %p127
      %p129 = scmp.ne.s32.totalorder %s121, %s123
      %p130 = scmp.eq.s32.totalorder %s31, 1
      %p131 = por %p129, %p130
      %p132 = scmp.ne.s32.totalorder %s123, %s124
      %p133 = scmp.eq.s32.totalorder %s31, 0
      %p134 = por %p132, %p133
      %p135 = scmp.ne.s32.totalorder %s123, %s124
      %p136 = scmp.eq.s32.totalorder %s32, 1
      %p137 = por %p135, %p136
      %p139 = scmp.ne.s32.totalorder %s124, %s138
      %p140 = scmp.eq.s32.totalorder %s32, 0
      %p141 = por %p139, %p140
      %s143 = sadd.s32 %s142, 1
      %p146 = scmp.eq.s32.totalorder %s26, 1
      %p147 = scmp.ne.s32.totalorder %s142, %s144
      %p148 = scmp.eq.s32.totalorder %s26, 0
      %p149 = por %p147, %p148
      %p150 = scmp.ne.s32.totalorder %s142, %s144
      %p151 = scmp.eq.s32.totalorder %s31, 1
      %p152 = por %p150, %p151
      %p153 = scmp.ne.s32.totalorder %s144, %s145
      %p154 = scmp.eq.s32.totalorder %s31, 0
      %p155 = por %p153, %p154
      %p156 = scmp.ne.s32.totalorder %s144, %s145
      %p157 = scmp.eq.s32.totalorder %s32, 1
      %p158 = por %p156, %p157
      %p160 = scmp.ne.s32.totalorder %s145, %s159
      %p161 = scmp.eq.s32.totalorder %s32, 0
      %p162 = por %p160, %p161
      %s164 = sadd.s32 %s163, 1
      %p167 = scmp.eq.s32.totalorder %s26, 1
      %p168 = scmp.ne.s32.totalorder %s163, %s165
      %p169 = scmp.eq.s32.totalorder %s26, 0
      %p170 = por %p168, %p169
      %p171 = scmp.ne.s32.totalorder %s163, %s165
      %p172 = scmp.eq.s32.totalorder %s31, 1
      %p173 = por %p171, %p172
      %p174 = scmp.ne.s32.totalorder %s165, %s166
      %p175 = scmp.eq.s32.totalorder %s31, 0
      %p176 = por %p174, %p175
      %p177 = scmp.ne.s32.totalorder %s165, %s166
      %p178 = scmp.eq.s32.totalorder %s32, 1
      %p179 = por %p177, %p178
      %p181 = scmp.ne.s32.totalorder %s166, %s180
      %p182 = scmp.eq.s32.totalorder %s32, 0
      %p183 = por %p181, %p182
      %s185 = sadd.s32 %s184, 1
      %p188 = scmp.eq.s32.totalorder %s26, 1
      %p189 = scmp.ne.s32.totalorder %s184, %s186
      %p190 = scmp.eq.s32.totalorder %s26, 0
      %p191 = por %p189, %p190
      %p192 = scmp.ne.s32.totalorder %s184, %s186
      %p193 = scmp.eq.s32.totalorder %s31, 1
      %p194 = por %p192, %p193
      %p195 = scmp.ne.s32.totalorder %s186, %s187
      %p196 = scmp.eq.s32.totalorder %s31, 0
      %p197 = por %p195, %p196
      %p198 = scmp.ne.s32.totalorder %s186, %s187
      %p199 = scmp.eq.s32.totalorder %s32, 1
      %p200 = por %p198, %p199
      %p202 = scmp.ne.s32.totalorder %s187, %s201
      %p203 = scmp.eq.s32.totalorder %s32, 0
      %p204 = por %p202, %p203
      %s206 = sadd.s32 %s205, 1
      %p209 = scmp.eq.s32.totalorder %s26, 1
      %p210 = scmp.ne.s32.totalorder %s205, %s207
      %p211 = scmp.eq.s32.totalorder %s26, 0
      %p212 = por %p210, %p211
      %p213 = scmp.ne.s32.totalorder %s205, %s207
      %p214 = scmp.eq.s32.totalorder %s31, 1
      %p215 = por %p213, %p214
      %p216 = scmp.ne.s32.totalorder %s207, %s208
      %p217 = scmp.eq.s32.totalorder %s31, 0
      %p218 = por %p216, %p217
      %p219 = scmp.ne.s32.totalorder %s207, %s208
      %p220 = scmp.eq.s32.totalorder %s32, 1
      %p221 = por %p219, %p220
      %p223 = scmp.ne.s32.totalorder %s208, %s222
      %p224 = scmp.eq.s32.totalorder %s32, 0
      %p225 = por %p223, %p224
      %s227 = sadd.s32 %s226, 1
      %p230 = scmp.eq.s32.totalorder %s26, 1
      %p231 = scmp.ne.s32.totalorder %s226, %s228
      %p232 = scmp.eq.s32.totalorder %s26, 0
      %p233 = por %p231, %p232
      %p234 = scmp.ne.s32.totalorder %s226, %s228
      %p235 = scmp.eq.s32.totalorder %s31, 1
      %p236 = por %p234, %p235
      %p237 = scmp.ne.s32.totalorder %s228, %s229
      %p238 = scmp.eq.s32.totalorder %s31, 0
      %p239 = por %p237, %p238
      %p240 = scmp.ne.s32.totalorder %s228, %s229
      %p241 = scmp.eq.s32.totalorder %s32, 1
      %p242 = por %p240, %p241
      %p244 = scmp.ne.s32.totalorder %s229, %s243
      %p245 = scmp.eq.s32.totalorder %s32, 0
      %p246 = por %p244, %p245
      %s248 = sadd.s32 %s247, 1
      %p251 = scmp.eq.s32.totalorder %s26, 1
      %p252 = scmp.ne.s32.totalorder %s247, %s249
      %p253 = scmp.eq.s32.totalorder %s26, 0
      %p254 = por %p252, %p253
      %p255 = scmp.ne.s32.totalorder %s247, %s249
      %p256 = scmp.eq.s32.totalorder %s31, 1
      %p257 = por %p255, %p256
      %p258 = scmp.ne.s32.totalorder %s249, %s250
      %p259 = scmp.eq.s32.totalorder %s31, 0
      %p260 = por %p258, %p259
      %p261 = scmp.ne.s32.totalorder %s249, %s250
      %p262 = scmp.eq.s32.totalorder %s32, 1
      %p263 = por %p261, %p262
      %p265 = scmp.ne.s32.totalorder %s250, %s264
      %p266 = scmp.eq.s32.totalorder %s32, 0
      %p267 = por %p265, %p266
      %s268 = ssub.s32 %s33, %s45
      %s269 = ssub.s32 %s34, %s41
      %s270 = sor.u32 %s268, %s269
      %p271 = scmp.eq.s32.totalorder %s270, 0
      %s273 = sadd.s32 %s272, 1
      %s274 = scalar_select %p271, %s272, %s273
      %p277 = pneg %p271
      %p278 = scmp.eq.s32.totalorder %s26, 1
      %p279 = por %p277, %p278
      %p280 = scmp.ne.s32.totalorder %s272, %s275
      %p281 = scmp.eq.s32.totalorder %s26, 0
      %p282 = por %p280, %p281
      %p283 = scmp.ne.s32.totalorder %s272, %s275
      %p284 = scmp.eq.s32.totalorder %s31, 1
      %p285 = por %p283, %p284
      %p286 = scmp.ne.s32.totalorder %s275, %s276
      %p287 = scmp.eq.s32.totalorder %s31, 0
      %p288 = por %p286, %p287
      %p289 = scmp.ne.s32.totalorder %s275, %s276
      %p290 = scmp.eq.s32.totalorder %s32, 1
      %p291 = por %p289, %p290
      %p293 = scmp.ne.s32.totalorder %s276, %s292
      %p294 = scmp.eq.s32.totalorder %s32, 0
      %p295 = por %p293, %p294
      %p296 = scmp.le.s32.totalorder 1, %s26
      %p297 = scmp.lt.s32.totalorder %s26, 3
      %p298 = pnand %p296, %p297
      %p299 = pneg %p298
      // Predicated region
      $region9: #{tpu_custom_call.1} parent=5 // pred_check
        _
      $region10: #{tpu_custom_call.1} parent=5 // pred_check_branch
        %301 = sbr.rel (%p298) target = $region12
      $region11: #{tpu_custom_call.1} parent=5 // pred_region
        %s302 = ssub.s32 %s26, 1
        // Predicated region
        $region13: #{tpu_custom_call.1} parent=11 // pred_check
          %p303 = pneg %p113
        $region14: #{tpu_custom_call.1} parent=11 // pred_check_branch
          %305 = sbr.rel (%p303) target = $region16
        $region15: #{tpu_custom_call.1} parent=11 // pred_region
          %s307 = ssub.s32 256, 256
          %308 = vsyncadd [#allocation7], %s307
          %s309 = sshll.u32 [#allocation8], 4
          %s310 = int_to_ptr.vmem [resolvable:$true] %s309
          %315 = dma.hbm_to_vmem [thread:$0]  %s2, 256, %s310, [#allocation7], 128, 128, 8
        $region16: #{tpu_custom_call.1} parent=11 // pred_fallthru
          _
        // Predicated region
        $region17: #{tpu_custom_call.1} parent=11 // pred_check
          %p316 = pneg %p134
        $region18: #{tpu_custom_call.1} parent=11 // pred_check_branch
          %318 = sbr.rel (%p316) target = $region20
        $region19: #{tpu_custom_call.1} parent=11 // pred_region
          _
        $region20: #{tpu_custom_call.1} parent=11 // pred_fallthru
          _
        // Predicated region
        $region21: #{tpu_custom_call.1} parent=11 // pred_check
          %p319 = pneg %p155
        $region22: #{tpu_custom_call.1} parent=11 // pred_check_branch
          %321 = sbr.rel (%p319) target = $region24
        $region23: #{tpu_custom_call.1} parent=11 // pred_region
          %s323 = ssub.s32 256, 256
          %324 = vsyncadd [#allocation10], %s323
          %s325 = sshll.u32 [#allocation9], 4
          %s326 = int_to_ptr.vmem [resolvable:$true] %s325
          %331 = dma.hbm_to_vmem [thread:$0]  %s4, 256, %s326, [#allocation10], 128, 128, 8
        $region24: #{tpu_custom_call.1} parent=11 // pred_fallthru
          _
        // Predicated region
        $region25: #{tpu_custom_call.1} parent=11 // pred_check
          %p332 = pneg %p176
        $region26: #{tpu_custom_call.1} parent=11 // pred_check_branch
          %334 = sbr.rel (%p332) target = $region28
        $region27: #{tpu_custom_call.1} parent=11 // pred_region
          _
        $region28: #{tpu_custom_call.1} parent=11 // pred_fallthru
          _
        // Predicated region
        $region29: #{tpu_custom_call.1} parent=11 // pred_check
          %p335 = pneg %p197
        $region30: #{tpu_custom_call.1} parent=11 // pred_check_branch
          %337 = sbr.rel (%p335) target = $region32
        $region31: #{tpu_custom_call.1} parent=11 // pred_region
          _
        $region32: #{tpu_custom_call.1} parent=11 // pred_fallthru
          _
        // Predicated region
        $region33: #{tpu_custom_call.1} parent=11 // pred_check
          %p338 = pneg %p218
        $region34: #{tpu_custom_call.1} parent=11 // pred_check_branch
          %340 = sbr.rel (%p338) target = $region36
        $region35: #{tpu_custom_call.1} parent=11 // pred_region
          _
        $region36: #{tpu_custom_call.1} parent=11 // pred_fallthru
          _
        // Predicated region
        $region37: #{tpu_custom_call.1} parent=11 // pred_check
          %p341 = pneg %p239
        $region38: #{tpu_custom_call.1} parent=11 // pred_check_branch
          %343 = sbr.rel (%p341) target = $region40
        $region39: #{tpu_custom_call.1} parent=11 // pred_region
          %s345 = ssub.s32 512, 512
          %346 = vsyncadd [#allocation10], %s345
          %s347 = sshll.u32 [#allocation11], 4
          %s348 = int_to_ptr.vmem [resolvable:$true] %s347
          %353 = dma.hbm_to_vmem [thread:$0]  %s8, 512, %s348, [#allocation10], 128, 128, 8
        $region40: #{tpu_custom_call.1} parent=11 // pred_fallthru
          _
        // Predicated region
        $region41: #{tpu_custom_call.1} parent=11 // pred_check
          %p354 = pneg %p260
        $region42: #{tpu_custom_call.1} parent=11 // pred_check_branch
          %356 = sbr.rel (%p354) target = $region44
        $region43: #{tpu_custom_call.1} parent=11 // pred_region
          _
        $region44: #{tpu_custom_call.1} parent=11 // pred_fallthru
          _
      $region12: #{tpu_custom_call.1} parent=5 // pred_fallthru
        _
      %p357 = scmp.lt.s32.totalorder %s26, 2
      // Predicated region
      $region45: #{tpu_custom_call.1} parent=5 // pred_check
        %p358 = pneg %p357
      $region46: #{tpu_custom_call.1} parent=5 // pred_check_branch
        %360 = sbr.rel (%p358) target = $region48
      $region47: #{tpu_custom_call.1} parent=5 // pred_region
        // Predicated region
        $region49: #{tpu_custom_call.1} parent=47 // pred_check
          %p361 = pneg %p60
        $region50: #{tpu_custom_call.1} parent=47 // pred_check_branch
          %363 = sbr.rel (%p361) target = $region52
        $region51: #{tpu_custom_call.1} parent=47 // pred_region
          %s364 = sand.u32 %s50, 1
          %s365 = scalar_lea.sflag [#allocation4], %s364
          %s366 = sand.u32 %s50, 1
          %s367 = smul.addr %s366, 8
          %s368 = scalar_lea.vmem [#allocation3], %s367
          %s370 = ssub.s32 128, 128
          %371 = vsyncadd %s365, %s370
          %s372 = sadd.s32 %s34, %s33
          %s373 = smul.addr %s372, 128
          %s374 = scalar_lea.hbm %s0, %s373
          %s376 = sshll.u32 %s368, 4
          %s377 = int_to_ptr.vmem [resolvable:$true] %s376
          %379 = dma.hbm_to_vmem [thread:$0]  %s374, 128, %s377, %s365
        $region52: #{tpu_custom_call.1} parent=47 // pred_fallthru
          _
        // Predicated region
        $region53: #{tpu_custom_call.1} parent=47 // pred_check
          %p380 = pneg %p86
        $region54: #{tpu_custom_call.1} parent=47 // pred_check_branch
          %382 = sbr.rel (%p380) target = $region56
        $region55: #{tpu_custom_call.1} parent=47 // pred_region
          %s383 = sand.u32 %s26, 1
          %s384 = scalar_lea.sflag [#allocation7], %s383
          %s385 = sand.u32 %s76, 1
          %s386 = smul.addr %s385, 8
          %s387 = scalar_lea.vmem [#allocation6], %s386
          %s389 = ssub.s32 128, 128
          %390 = vsyncadd %s384, %s389
          %s391 = smul.addr %s33, 128
          %s392 = scalar_lea.hbm %s1, %s391
          %s394 = sshll.u32 %s387, 4
          %s395 = int_to_ptr.vmem [resolvable:$true] %s394
          %397 = dma.hbm_to_vmem [thread:$0]  %s392, 128, %s395, %s384
        $region56: #{tpu_custom_call.1} parent=47 // pred_fallthru
          _
      $region48: #{tpu_custom_call.1} parent=5 // pred_fallthru
        _
      %p398 = scmp.le.s32.totalorder 1, %s26
      %p399 = scmp.lt.s32.totalorder %s26, 3
      %p400 = pnand %p398, %p399
      %p401 = pneg %p400
      // Predicated region
      $region57: #{tpu_custom_call.1} parent=5 // pred_check
        _
      $region58: #{tpu_custom_call.1} parent=5 // pred_check_branch
        %403 = sbr.rel (%p400) target = $region60
      $region59: #{tpu_custom_call.1} parent=5 // pred_region
        %s404 = ssub.s32 %s26, 1
        %s405 = sand.u32 %s53, 1
        %s406 = scalar_lea.sflag [#allocation4], %s405
        %s407 = sand.u32 %s53, 1
        %s408 = smul.addr %s407, 8
        %s409 = scalar_lea.vmem [#allocation3], %s408
        // Predicated region
        $region61: #{tpu_custom_call.1} parent=59 // pred_check
          %p410 = pneg %p66
        $region62: #{tpu_custom_call.1} parent=59 // pred_check_branch
          %412 = sbr.rel (%p410) target = $region64
        $region63: #{tpu_custom_call.1} parent=59 // pred_region
          %413 = dma.done %s406, 128
        $region64: #{tpu_custom_call.1} parent=59 // pred_fallthru
          _
        %s414 = sand.u32 %s31, 1
        %s415 = scalar_lea.sflag [#allocation7], %s414
        %s416 = sand.u32 %s79, 1
        %s417 = smul.addr %s416, 8
        %s418 = scalar_lea.vmem [#allocation6], %s417
        // Predicated region
        $region65: #{tpu_custom_call.1} parent=59 // pred_check
          %p419 = pneg %p92
        $region66: #{tpu_custom_call.1} parent=59 // pred_check_branch
          %421 = sbr.rel (%p419) target = $region68
        $region67: #{tpu_custom_call.1} parent=59 // pred_region
          %422 = dma.done %s415, 128
        $region68: #{tpu_custom_call.1} parent=59 // pred_fallthru
          _
        // Predicated region
        $region69: #{tpu_custom_call.1} parent=59 // pred_check
          %p423 = pneg %p113
        $region70: #{tpu_custom_call.1} parent=59 // pred_check_branch
          %425 = sbr.rel (%p423) target = $region72
        $region71: #{tpu_custom_call.1} parent=59 // pred_region
          %426 = dma.done [#allocation7], 256
        $region72: #{tpu_custom_call.1} parent=59 // pred_fallthru
          _
        // Predicated region
        $region73: #{tpu_custom_call.1} parent=59 // pred_check
          %p427 = pneg %p155
        $region74: #{tpu_custom_call.1} parent=59 // pred_check_branch
          %429 = sbr.rel (%p427) target = $region76
        $region75: #{tpu_custom_call.1} parent=59 // pred_region
          %430 = dma.done [#allocation10], 256
        $region76: #{tpu_custom_call.1} parent=59 // pred_fallthru
          _
        // Predicated region
        $region77: #{tpu_custom_call.1} parent=59 // pred_check
          %p431 = pneg %p239
        $region78: #{tpu_custom_call.1} parent=59 // pred_check_branch
          %433 = sbr.rel (%p431) target = $region80
        $region79: #{tpu_custom_call.1} parent=59 // pred_region
          %434 = dma.done [#allocation10], 512
        $region80: #{tpu_custom_call.1} parent=59 // pred_fallthru
          _
        %s435 = sand.u32 %s53, 1
        %s436 = scalar_lea.sflag [#allocation4], %s435
        %s437 = sand.u32 %s53, 1
        %s438 = smul.addr %s437, 8
        %s439 = scalar_lea.vmem [#allocation3], %s438
        %p440 = pneg %p66
        %p441 = pneg %p63
        %s442 = sand.u32 %s31, 1
        %s443 = scalar_lea.sflag [#allocation7], %s442
        %s444 = sand.u32 %s79, 1
        %s445 = smul.addr %s444, 8
        %s446 = scalar_lea.vmem [#allocation6], %s445
        %p447 = pneg %p92
        %p448 = pneg %p89
        %p449 = pneg %p113
        %p450 = pneg %p110
        %p451 = pneg %p134
        %p452 = pneg %p131
        %p453 = pneg %p155
        %p454 = pneg %p152
        %p455 = pneg %p176
        %p456 = pneg %p173
        %p457 = pneg %p197
        %p458 = pneg %p194
        %p459 = pneg %p218
        %p460 = pneg %p215
        %p461 = pneg %p239
        %p462 = pneg %p236
        %p463 = pneg %p260
        %p464 = pneg %p257
        %p465 = pneg %p288
        %p466 = pneg %p285
        %s467 = sand.u32 %s275, 1
        %s468 = scalar_lea.sflag [#allocation5], %s467
        %s469 = sand.u32 %s275, 1
        %s470 = smul.addr %s469, 8
        %s471 = scalar_lea.vmem [#allocation12], %s470
        %v473 = vld [vmem:[%s409] sm:$0xff]
        %v474 = vpack.c.bf16 %v473, %v473
        %v475 = vld [vmem:[#allocation8] sm:$0xff]
        %v476 = vld [vmem:[#allocation8 + $0x8] sm:$0xff]
        %v477 = vpack.c.bf16 %v476, %v475
        %v478 = vld [vmem:[%s3] sm:$0x1]
        %v480 = vlaneseq
        %v481 = vshrl.u32 %v480, 7
        %v482 = vsub.s32 0, %v481
        %v483 = vrot.slane %v478, %v482
        %vm485 = vcmask 130048
        %v487 = vsel %vm485, %v474, 0
        %489 = vmatprep.subr.bf16.mxu0 0
        %490 = vmatpush1.bf16.msra.mxu0 %v477
        %491 = vmatprep.subr.bf16.mxu0 0
        %492 = vmatpush1.bf16.msra.mxu0 0
        %493 = vmatprep.subr.bf16.mxu0 0
        %494 = vmatpush1.bf16.msra.mxu0 0
        %495 = vmatprep.subr.bf16.mxu0 0
        %496 = vmatpush1.bf16.msra.mxu0 0
        %497 = vmatprep.subr.bf16.mxu0 0
        %498 = vmatpush1.bf16.msra.mxu0 0
        %499 = vmatprep.subr.bf16.mxu0 0
        %500 = vmatpush1.bf16.msra.mxu0 0
        %501 = vmatprep.subr.bf16.mxu0 0
        %502 = vmatpush1.bf16.msra.mxu0 0
        %503 = vmatprep.subr.bf16.mxu0 0
        %504 = vmatpush1.bf16.msra.mxu0 0
        %505 = vmatprep.subr.bf16.mxu0 0
        %506 = vmatpush1.bf16.msra.mxu0 0
        %507 = vmatprep.subr.bf16.mxu0 0
        %508 = vmatpush1.bf16.msra.mxu0 0
        %509 = vmatprep.subr.bf16.mxu0 0
        %510 = vmatpush1.bf16.msra.mxu0 0
        %511 = vmatprep.subr.bf16.mxu0 0
        %512 = vmatpush1.bf16.msra.mxu0 0
        %513 = vmatprep.subr.bf16.mxu0 0
        %514 = vmatpush1.bf16.msra.mxu0 0
        %515 = vmatprep.subr.bf16.mxu0 0
        %516 = vmatpush1.bf16.msra.mxu0 0
        %517 = vmatprep.subr.bf16.mxu0 0
        %518 = vmatpush1.bf16.msra.mxu0 0
        %519 = vmatprep.subr.bf16.mxu0 0
        %520 = vmatpush1.bf16.msra.mxu0 0
        %521 = vmatprep.mubr.bf16.mxu0 0
        %522 = vmatmul.mubr.bf16.gmra.mrb[0].mxu0 %v487
        %v523 = vpop.f32.mrb[0].mxu0
        %v524 = vadd.f32 %v483, %v523
        %v525 = vpop.f32.mrb[0].mxu0
        %v526 = vpop.f32.mrb[0].mxu0
        %v527 = vpop.f32.mrb[0].mxu0
        %528 = vdwg.mxu0
        %v529 = vmul.f32 %v524, 0.17677669
        %v530 = vpack.c.bf16 %v529, %v529
        %v531 = vld [vmem:[#allocation9] sm:$0xff]
        %v532 = vld [vmem:[#allocation9 + $0x8] sm:$0xff]
        %v533 = vpack.c.bf16 %v532, %v531
        %v534 = vld [vmem:[%s6] sm:$0xff]
        %v535 = vld [vmem:[%s6 + $0x8] sm:$0xff]
        %v536 = vpack.c.bf16 %v535, %v534
        %v537 = vld [vmem:[%s5] sm:$0x1]
        %v538 = vld [vmem:[%s7] sm:$0x1]
        %v539 = vld [vmem:[%s418] sm:$0xff]
        %v540 = vpack.c.bf16 %v539, %v539
        %v542 = vlaneseq
        %v543 = vshrl.u32 %v542, 7
        %v544 = vsub.s32 0, %v543
        %v545 = vrot.slane %v537, %v544
        %v548 = vsel %vm485, %v540, 0
        %550 = vmatprep.subr.bf16.mxu0 0
        %551 = vmatpush1.bf16.msra.mxu0 %v533
        %552 = vmatprep.subr.bf16.mxu0 0
        %553 = vmatpush1.bf16.msra.mxu0 0
        %554 = vmatprep.subr.bf16.mxu0 0
        %555 = vmatpush1.bf16.msra.mxu0 0
        %556 = vmatprep.subr.bf16.mxu0 0
        %557 = vmatpush1.bf16.msra.mxu0 0
        %558 = vmatprep.subr.bf16.mxu0 0
        %559 = vmatpush1.bf16.msra.mxu0 0
        %560 = vmatprep.subr.bf16.mxu0 0
        %561 = vmatpush1.bf16.msra.mxu0 0
        %562 = vmatprep.subr.bf16.mxu0 0
        %563 = vmatpush1.bf16.msra.mxu0 0
        %564 = vmatprep.subr.bf16.mxu0 0
        %565 = vmatpush1.bf16.msra.mxu0 0
        %566 = vmatprep.subr.bf16.mxu0 0
        %567 = vmatpush1.bf16.msra.mxu0 0
        %568 = vmatprep.subr.bf16.mxu0 0
        %569 = vmatpush1.bf16.msra.mxu0 0
        %570 = vmatprep.subr.bf16.mxu0 0
        %571 = vmatpush1.bf16.msra.mxu0 0
        %572 = vmatprep.subr.bf16.mxu0 0
        %573 = vmatpush1.bf16.msra.mxu0 0
        %574 = vmatprep.subr.bf16.mxu0 0
        %575 = vmatpush1.bf16.msra.mxu0 0
        %576 = vmatprep.subr.bf16.mxu0 0
        %577 = vmatpush1.bf16.msra.mxu0 0
        %578 = vmatprep.subr.bf16.mxu0 0
        %579 = vmatpush1.bf16.msra.mxu0 0
        %580 = vmatprep.subr.bf16.mxu0 0
        %581 = vmatpush1.bf16.msra.mxu0 0
        %582 = vmatprep.mubr.bf16.mxu0 0
        %583 = vmatmul.mubr.bf16.gmra.mrb[0].mxu0 %v548
        %v584 = vpop.f32.mrb[0].mxu0
        %v585 = vadd.f32 %v545, %v584
        %v586 = vpop.f32.mrb[0].mxu0
        %v587 = vpop.f32.mrb[0].mxu0
        %v588 = vpop.f32.mrb[0].mxu0
        %589 = vdwg.mxu0
        %v590 = vpack.c.bf16 %v585, %v585
        %v592 = vlaneseq
        %v593 = vshrl.u32 %v592, 7
        %v594 = vsub.s32 0, %v593
        %v595 = vrot.slane %v538, %v594
        %597 = vmatprep.subr.bf16.mxu0 0
        %598 = vmatpush1.bf16.msra.mxu0 %v536
        %599 = vmatprep.subr.bf16.mxu0 0
        %600 = vmatpush1.bf16.msra.mxu0 0
        %601 = vmatprep.subr.bf16.mxu0 0
        %602 = vmatpush1.bf16.msra.mxu0 0
        %603 = vmatprep.subr.bf16.mxu0 0
        %604 = vmatpush1.bf16.msra.mxu0 0
        %605 = vmatprep.subr.bf16.mxu0 0
        %606 = vmatpush1.bf16.msra.mxu0 0
        %607 = vmatprep.subr.bf16.mxu0 0
        %608 = vmatpush1.bf16.msra.mxu0 0
        %609 = vmatprep.subr.bf16.mxu0 0
        %610 = vmatpush1.bf16.msra.mxu0 0
        %611 = vmatprep.subr.bf16.mxu0 0
        %612 = vmatpush1.bf16.msra.mxu0 0
        %613 = vmatprep.subr.bf16.mxu0 0
        %614 = vmatpush1.bf16.msra.mxu0 0
        %615 = vmatprep.subr.bf16.mxu0 0
        %616 = vmatpush1.bf16.msra.mxu0 0
        %617 = vmatprep.subr.bf16.mxu0 0
        %618 = vmatpush1.bf16.msra.mxu0 0
        %619 = vmatprep.subr.bf16.mxu0 0
        %620 = vmatpush1.bf16.msra.mxu0 0
        %621 = vmatprep.subr.bf16.mxu0 0
        %622 = vmatpush1.bf16.msra.mxu0 0
        %623 = vmatprep.subr.bf16.mxu0 0
        %624 = vmatpush1.bf16.msra.mxu0 0
        %625 = vmatprep.subr.bf16.mxu0 0
        %626 = vmatpush1.bf16.msra.mxu0 0
        %627 = vmatprep.subr.bf16.mxu0 0
        %628 = vmatpush1.bf16.msra.mxu0 0
        %629 = vmatprep.mubr.bf16.mxu0 0
        %630 = vmatmul.mubr.bf16.gmra.mrb[0].mxu0 %v548
        %v631 = vpop.f32.mrb[0].mxu0
        %v632 = vadd.f32 %v595, %v631
        %v633 = vpop.f32.mrb[0].mxu0
        %v634 = vpop.f32.mrb[0].mxu0
        %v635 = vpop.f32.mrb[0].mxu0
        %636 = vdwg.mxu0
        %v637 = vpack.c.bf16 %v632, %v632
        %vm638 = vcmask 64512
        %v640 = vsel %vm638, %v530, 0
        %v643 = vsel %vm638, %v590, 0
        %645 = vmatprep.subr.bf16.mxu0 0
        %646 = vmatpush1.bf16.xpose.msra.mxu0 %v643
        %647 = vmatprep.subr.bf16.mxu0 0
        %648 = vmatpush1.bf16.xpose.msra.mxu0 0
        %649 = vmatprep.subr.bf16.mxu0 0
        %650 = vmatpush1.bf16.xpose.msra.mxu0 0
        %651 = vmatprep.subr.bf16.mxu0 0
        %652 = vmatpush1.bf16.xpose.msra.mxu0 0
        %653 = vmatprep.subr.bf16.mxu0 0
        %654 = vmatpush1.bf16.xpose.msra.mxu0 0
        %655 = vmatprep.subr.bf16.mxu0 0
        %656 = vmatpush1.bf16.xpose.msra.mxu0 0
        %657 = vmatprep.subr.bf16.mxu0 0
        %658 = vmatpush1.bf16.xpose.msra.mxu0 0
        %659 = vmatprep.subr.bf16.mxu0 0
        %660 = vmatpush1.bf16.xpose.msra.mxu0 0
        %661 = vmatprep.subr.bf16.mxu0 0
        %662 = vmatpush1.bf16.xpose.msra.mxu0 0
        %663 = vmatprep.subr.bf16.mxu0 0
        %664 = vmatpush1.bf16.xpose.msra.mxu0 0
        %665 = vmatprep.subr.bf16.mxu0 0
        %666 = vmatpush1.bf16.xpose.msra.mxu0 0
        %667 = vmatprep.subr.bf16.mxu0 0
        %668 = vmatpush1.bf16.xpose.msra.mxu0 0
        %669 = vmatprep.subr.bf16.mxu0 0
        %670 = vmatpush1.bf16.xpose.msra.mxu0 0
        %671 = vmatprep.subr.bf16.mxu0 0
        %672 = vmatpush1.bf16.xpose.msra.mxu0 0
        %673 = vmatprep.subr.bf16.mxu0 0
        %674 = vmatpush1.bf16.xpose.msra.mxu0 0
        %675 = vmatprep.subr.bf16.mxu0 0
        %676 = vmatpush1.bf16.xpose.msra.mxu0 0
        %677 = vmatprep.mubr.bf16.mxu0 0
        %678 = vmatmul.mubr.bf16.gmra.mrb[0].mxu0 %v640
        %v679 = vpop.f32.mrb[0].mxu0
        %v680 = vadd.f32 0.0, %v679
        %v681 = vpop.f32.mrb[0].mxu0
        %v682 = vpop.f32.mrb[0].mxu0
        %v683 = vpop.f32.mrb[0].mxu0
        %684 = vdwg.mxu0
        %v685 = vsel %vm638, %v680, -inf
        %686 = vmax.xlane.f32.xlu0 %v685
        %v687 = vpop.xlane.xlu0 %686
        %v688 = vsub.f32 -inf, %v687
        %v689 = vmul.f32 %v688, 1.442695
        %v690 = vpow.pop %v689
        %v691 = vsub.f32 %v680, %v687
        %v692 = vmul.f32 %v691, 1.442695
        %v693 = vpow.pop %v692
        %v694 = vmul.f32 %v690, 0.0
        %v695 = vsel %vm638, %v693, 0.0
        %696 = vadd.xlane.f32.xlu0 %v695
        %v697 = vpop.xlane.xlu0 %696
        %v698 = vadd.f32 %v694, %v697
        %v699 = vpack.c.bf16 %v693, %v693
        %v701 = vsel %vm638, %v699, 0
        %vm703 = vcmask 1043456
        %v705 = vsel %vm703, %v637, 0
        %707 = vmatprep.subr.bf16.mxu0 0
        %708 = vmatpush1.bf16.msra.mxu0 %v705
        %709 = vmatprep.subr.bf16.mxu0 0
        %710 = vmatpush1.bf16.msra.mxu0 0
        %711 = vmatprep.subr.bf16.mxu0 0
        %712 = vmatpush1.bf16.msra.mxu0 0
        %713 = vmatprep.subr.bf16.mxu0 0
        %714 = vmatpush1.bf16.msra.mxu0 0
        %715 = vmatprep.subr.bf16.mxu0 0
        %716 = vmatpush1.bf16.msra.mxu0 0
        %717 = vmatprep.subr.bf16.mxu0 0
        %718 = vmatpush1.bf16.msra.mxu0 0
        %719 = vmatprep.subr.bf16.mxu0 0
        %720 = vmatpush1.bf16.msra.mxu0 0
        %721 = vmatprep.subr.bf16.mxu0 0
        %722 = vmatpush1.bf16.msra.mxu0 0
        %723 = vmatprep.subr.bf16.mxu0 0
        %724 = vmatpush1.bf16.msra.mxu0 0
        %725 = vmatprep.subr.bf16.mxu0 0
        %726 = vmatpush1.bf16.msra.mxu0 0
        %727 = vmatprep.subr.bf16.mxu0 0
        %728 = vmatpush1.bf16.msra.mxu0 0
        %729 = vmatprep.subr.bf16.mxu0 0
        %730 = vmatpush1.bf16.msra.mxu0 0
        %731 = vmatprep.subr.bf16.mxu0 0
        %732 = vmatpush1.bf16.msra.mxu0 0
        %733 = vmatprep.subr.bf16.mxu0 0
        %734 = vmatpush1.bf16.msra.mxu0 0
        %735 = vmatprep.subr.bf16.mxu0 0
        %736 = vmatpush1.bf16.msra.mxu0 0
        %737 = vmatprep.subr.bf16.mxu0 0
        %738 = vmatpush1.bf16.msra.mxu0 0
        %739 = vmatprep.mubr.bf16.mxu0 0
        %740 = vmatmul.mubr.bf16.gmra.mrb[0].mxu0 %v701
        %v741 = vpop.f32.mrb[0].mxu0
        %v742 = vadd.f32 0.0, %v741
        %v743 = vpop.f32.mrb[0].mxu0
        %v744 = vpop.f32.mrb[0].mxu0
        %v745 = vpop.f32.mrb[0].mxu0
        %746 = vdwg.mxu0
        %v747 = vadd.f32 %v694, %v742
        %749 = vrot.lane.b32.xlu0 %v530, 120
        %v750 = vpop.permute.xlu0 %749
        %752 = vrot.lane.b32.xlu0 %v590, 120
        %v753 = vpop.permute.xlu0 %752
        %v755 = vsel %vm638, %v750, 0
        %v758 = vsel %vm638, %v753, 0
        %760 = vmatprep.subr.bf16.mxu0 0
        %761 = vmatpush1.bf16.xpose.msra.mxu0 %v758
        %762 = vmatprep.subr.bf16.mxu0 0
        %763 = vmatpush1.bf16.xpose.msra.mxu0 0
        %764 = vmatprep.subr.bf16.mxu0 0
        %765 = vmatpush1.bf16.xpose.msra.mxu0 0
        %766 = vmatprep.subr.bf16.mxu0 0
        %767 = vmatpush1.bf16.xpose.msra.mxu0 0
        %768 = vmatprep.subr.bf16.mxu0 0
        %769 = vmatpush1.bf16.xpose.msra.mxu0 0
        %770 = vmatprep.subr.bf16.mxu0 0
        %771 = vmatpush1.bf16.xpose.msra.mxu0 0
        %772 = vmatprep.subr.bf16.mxu0 0
        %773 = vmatpush1.bf16.xpose.msra.mxu0 0
        %774 = vmatprep.subr.bf16.mxu0 0
        %775 = vmatpush1.bf16.xpose.msra.mxu0 0
        %776 = vmatprep.subr.bf16.mxu0 0
        %777 = vmatpush1.bf16.xpose.msra.mxu0 0
        %778 = vmatprep.subr.bf16.mxu0 0
        %779 = vmatpush1.bf16.xpose.msra.mxu0 0
        %780 = vmatprep.subr.bf16.mxu0 0
        %781 = vmatpush1.bf16.xpose.msra.mxu0 0
        %782 = vmatprep.subr.bf16.mxu0 0
        %783 = vmatpush1.bf16.xpose.msra.mxu0 0
        %784 = vmatprep.subr.bf16.mxu0 0
        %785 = vmatpush1.bf16.xpose.msra.mxu0 0
        %786 = vmatprep.subr.bf16.mxu0 0
        %787 = vmatpush1.bf16.xpose.msra.mxu0 0
        %788 = vmatprep.subr.bf16.mxu0 0
        %789 = vmatpush1.bf16.xpose.msra.mxu0 0
        %790 = vmatprep.subr.bf16.mxu0 0
        %791 = vmatpush1.bf16.xpose.msra.mxu0 0
        %792 = vmatprep.mubr.bf16.mxu0 0
        %793 = vmatmul.mubr.bf16.gmra.mrb[0].mxu0 %v755
        %v794 = vpop.f32.mrb[0].mxu0
        %v795 = vadd.f32 0.0, %v794
        %v796 = vpop.f32.mrb[0].mxu0
        %v797 = vpop.f32.mrb[0].mxu0
        %v798 = vpop.f32.mrb[0].mxu0
        %799 = vdwg.mxu0
        %v800 = vsel %vm638, %v795, -inf
        %801 = vmax.xlane.f32.xlu0 %v800
        %v802 = vpop.xlane.xlu0 %801
        %v803 = vsub.f32 -inf, %v802
        %v804 = vmul.f32 %v803, 1.442695
        %v805 = vpow.pop %v804
        %v806 = vsub.f32 %v795, %v802
        %v807 = vmul.f32 %v806, 1.442695
        %v808 = vpow.pop %v807
        %v809 = vmul.f32 %v805, 0.0
        %v810 = vsel %vm638, %v808, 0.0
        %811 = vadd.xlane.f32.xlu0 %v810
        %v812 = vpop.xlane.xlu0 %811
        %v813 = vadd.f32 %v809, %v812
        %v814 = vpack.c.bf16 %v808, %v808
        %816 = vrot.lane.b32.xlu0 %v637, 120
        %v817 = vpop.permute.xlu0 %816
        %v819 = vsel %vm638, %v814, 0
        %v822 = vsel %vm703, %v817, 0
        %824 = vmatprep.subr.bf16.mxu0 0
        %825 = vmatpush1.bf16.msra.mxu0 %v822
        %826 = vmatprep.subr.bf16.mxu0 0
        %827 = vmatpush1.bf16.msra.mxu0 0
        %828 = vmatprep.subr.bf16.mxu0 0
        %829 = vmatpush1.bf16.msra.mxu0 0
        %830 = vmatprep.subr.bf16.mxu0 0
        %831 = vmatpush1.bf16.msra.mxu0 0
        %832 = vmatprep.subr.bf16.mxu0 0
        %833 = vmatpush1.bf16.msra.mxu0 0
        %834 = vmatprep.subr.bf16.mxu0 0
        %835 = vmatpush1.bf16.msra.mxu0 0
        %836 = vmatprep.subr.bf16.mxu0 0
        %837 = vmatpush1.bf16.msra.mxu0 0
        %838 = vmatprep.subr.bf16.mxu0 0
        %839 = vmatpush1.bf16.msra.mxu0 0
        %840 = vmatprep.subr.bf16.mxu0 0
        %841 = vmatpush1.bf16.msra.mxu0 0
        %842 = vmatprep.subr.bf16.mxu0 0
        %843 = vmatpush1.bf16.msra.mxu0 0
        %844 = vmatprep.subr.bf16.mxu0 0
        %845 = vmatpush1.bf16.msra.mxu0 0
        %846 = vmatprep.subr.bf16.mxu0 0
        %847 = vmatpush1.bf16.msra.mxu0 0
        %848 = vmatprep.subr.bf16.mxu0 0
        %849 = vmatpush1.bf16.msra.mxu0 0
        %850 = vmatprep.subr.bf16.mxu0 0
        %851 = vmatpush1.bf16.msra.mxu0 0
        %852 = vmatprep.subr.bf16.mxu0 0
        %853 = vmatpush1.bf16.msra.mxu0 0
        %854 = vmatprep.subr.bf16.mxu0 0
        %855 = vmatpush1.bf16.msra.mxu0 0
        %856 = vmatprep.mubr.bf16.mxu0 0
        %857 = vmatmul.mubr.bf16.gmra.mrb[0].mxu0 %v819
        %v858 = vpop.f32.mrb[0].mxu0
        %v859 = vadd.f32 0.0, %v858
        %v860 = vpop.f32.mrb[0].mxu0
        %v861 = vpop.f32.mrb[0].mxu0
        %v862 = vpop.f32.mrb[0].mxu0
        %863 = vdwg.mxu0
        %v864 = vadd.f32 %v809, %v859
        %865 = vrot.lane.b32.xlu0 %v530, 112
        %v866 = vpop.permute.xlu0 %865
        %867 = vrot.lane.b32.xlu0 %v590, 112
        %v868 = vpop.permute.xlu0 %867
        %v870 = vsel %vm638, %v866, 0
        %v873 = vsel %vm638, %v868, 0
        %875 = vmatprep.subr.bf16.mxu0 0
        %876 = vmatpush1.bf16.xpose.msra.mxu0 %v873
        %877 = vmatprep.subr.bf16.mxu0 0
        %878 = vmatpush1.bf16.xpose.msra.mxu0 0
        %879 = vmatprep.subr.bf16.mxu0 0
        %880 = vmatpush1.bf16.xpose.msra.mxu0 0
        %881 = vmatprep.subr.bf16.mxu0 0
        %882 = vmatpush1.bf16.xpose.msra.mxu0 0
        %883 = vmatprep.subr.bf16.mxu0 0
        %884 = vmatpush1.bf16.xpose.msra.mxu0 0
        %885 = vmatprep.subr.bf16.mxu0 0
        %886 = vmatpush1.bf16.xpose.msra.mxu0 0
        %887 = vmatprep.subr.bf16.mxu0 0
        %888 = vmatpush1.bf16.xpose.msra.mxu0 0
        %889 = vmatprep.subr.bf16.mxu0 0
        %890 = vmatpush1.bf16.xpose.msra.mxu0 0
        %891 = vmatprep.subr.bf16.mxu0 0
        %892 = vmatpush1.bf16.xpose.msra.mxu0 0
        %893 = vmatprep.subr.bf16.mxu0 0
        %894 = vmatpush1.bf16.xpose.msra.mxu0 0
        %895 = vmatprep.subr.bf16.mxu0 0
        %896 = vmatpush1.bf16.xpose.msra.mxu0 0
        %897 = vmatprep.subr.bf16.mxu0 0
        %898 = vmatpush1.bf16.xpose.msra.mxu0 0
        %899 = vmatprep.subr.bf16.mxu0 0
        %900 = vmatpush1.bf16.xpose.msra.mxu0 0
        %901 = vmatprep.subr.bf16.mxu0 0
        %902 = vmatpush1.bf16.xpose.msra.mxu0 0
        %903 = vmatprep.subr.bf16.mxu0 0
        %904 = vmatpush1.bf16.xpose.msra.mxu0 0
        %905 = vmatprep.subr.bf16.mxu0 0
        %906 = vmatpush1.bf16.xpose.msra.mxu0 0
        %907 = vmatprep.mubr.bf16.mxu0 0
        %908 = vmatmul.mubr.bf16.gmra.mrb[0].mxu0 %v870
        %v909 = vpop.f32.mrb[0].mxu0
        %v910 = vadd.f32 0.0, %v909
        %v911 = vpop.f32.mrb[0].mxu0
        %v912 = vpop.f32.mrb[0].mxu0
        %v913 = vpop.f32.mrb[0].mxu0
        %914 = vdwg.mxu0
        %v915 = vsel %vm638, %v910, -inf
        %916 = vmax.xlane.f32.xlu0 %v915
        %v917 = vpop.xlane.xlu0 %916
        %v918 = vsub.f32 -inf, %v917
        %v919 = vmul.f32 %v918, 1.442695
        %v920 = vpow.pop %v919
        %v921 = vsub.f32 %v910, %v917
        %v922 = vmul.f32 %v921, 1.442695
        %v923 = vpow.pop %v922
        %v924 = vmul.f32 %v920, 0.0
        %v925 = vsel %vm638, %v923, 0.0
        %926 = vadd.xlane.f32.xlu0 %v925
        %v927 = vpop.xlane.xlu0 %926
        %v928 = vadd.f32 %v924, %v927
        %v929 = vpack.c.bf16 %v923, %v923
        %930 = vrot.lane.b32.xlu0 %v637, 112
        %v931 = vpop.permute.xlu0 %930
        %v933 = vsel %vm638, %v929, 0
        %v936 = vsel %vm703, %v931, 0
        %938 = vmatprep.subr.bf16.mxu0 0
        %939 = vmatpush1.bf16.msra.mxu0 %v936
        %940 = vmatprep.subr.bf16.mxu0 0
        %941 = vmatpush1.bf16.msra.mxu0 0
        %942 = vmatprep.subr.bf16.mxu0 0
        %943 = vmatpush1.bf16.msra.mxu0 0
        %944 = vmatprep.subr.bf16.mxu0 0
        %945 = vmatpush1.bf16.msra.mxu0 0
        %946 = vmatprep.subr.bf16.mxu0 0
        %947 = vmatpush1.bf16.msra.mxu0 0
        %948 = vmatprep.subr.bf16.mxu0 0
        %949 = vmatpush1.bf16.msra.mxu0 0
        %950 = vmatprep.subr.bf16.mxu0 0
        %951 = vmatpush1.bf16.msra.mxu0 0
        %952 = vmatprep.subr.bf16.mxu0 0
        %953 = vmatpush1.bf16.msra.mxu0 0
        %954 = vmatprep.subr.bf16.mxu0 0
        %955 = vmatpush1.bf16.msra.mxu0 0
        %956 = vmatprep.subr.bf16.mxu0 0
        %957 = vmatpush1.bf16.msra.mxu0 0
        %958 = vmatprep.subr.bf16.mxu0 0
        %959 = vmatpush1.bf16.msra.mxu0 0
        %960 = vmatprep.subr.bf16.mxu0 0
        %961 = vmatpush1.bf16.msra.mxu0 0
        %962 = vmatprep.subr.bf16.mxu0 0
        %963 = vmatpush1.bf16.msra.mxu0 0
        %964 = vmatprep.subr.bf16.mxu0 0
        %965 = vmatpush1.bf16.msra.mxu0 0
        %966 = vmatprep.subr.bf16.mxu0 0
        %967 = vmatpush1.bf16.msra.mxu0 0
        %968 = vmatprep.subr.bf16.mxu0 0
        %969 = vmatpush1.bf16.msra.mxu0 0
        %970 = vmatprep.mubr.bf16.mxu0 0
        %971 = vmatmul.mubr.bf16.gmra.mrb[0].mxu0 %v933
        %v972 = vpop.f32.mrb[0].mxu0
        %v973 = vadd.f32 0.0, %v972
        %v974 = vpop.f32.mrb[0].mxu0
        %v975 = vpop.f32.mrb[0].mxu0
        %v976 = vpop.f32.mrb[0].mxu0
        %977 = vdwg.mxu0
        %v978 = vadd.f32 %v924, %v973
        %979 = vrot.lane.b32.xlu0 %v530, 104
        %v980 = vpop.permute.xlu0 %979
        %981 = vrot.lane.b32.xlu0 %v590, 104
        %v982 = vpop.permute.xlu0 %981
        %v984 = vsel %vm638, %v980, 0
        %v987 = vsel %vm638, %v982, 0
        %989 = vmatprep.subr.bf16.mxu0 0
        %990 = vmatpush1.bf16.xpose.msra.mxu0 %v987
        %991 = vmatprep.subr.bf16.mxu0 0
        %992 = vmatpush1.bf16.xpose.msra.mxu0 0
        %993 = vmatprep.subr.bf16.mxu0 0
        %994 = vmatpush1.bf16.xpose.msra.mxu0 0
        %995 = vmatprep.subr.bf16.mxu0 0
        %996 = vmatpush1.bf16.xpose.msra.mxu0 0
        %997 = vmatprep.subr.bf16.mxu0 0
        %998 = vmatpush1.bf16.xpose.msra.mxu0 0
        %999 = vmatprep.subr.bf16.mxu0 0
        %1000 = vmatpush1.bf16.xpose.msra.mxu0 0
        %1001 = vmatprep.subr.bf16.mxu0 0
        %1002 = vmatpush1.bf16.xpose.msra.mxu0 0
        %1003 = vmatprep.subr.bf16.mxu0 0
        %1004 = vmatpush1.bf16.xpose.msra.mxu0 0
        %1005 = vmatprep.subr.bf16.mxu0 0
        %1006 = vmatpush1.bf16.xpose.msra.mxu0 0
        %1007 = vmatprep.subr.bf16.mxu0 0
        %1008 = vmatpush1.bf16.xpose.msra.mxu0 0
        %1009 = vmatprep.subr.bf16.mxu0 0
        %1010 = vmatpush1.bf16.xpose.msra.mxu0 0
        %1011 = vmatprep.subr.bf16.mxu0 0
        %1012 = vmatpush1.bf16.xpose.msra.mxu0 0
        %1013 = vmatprep.subr.bf16.mxu0 0
        %1014 = vmatpush1.bf16.xpose.msra.mxu0 0
        %1015 = vmatprep.subr.bf16.mxu0 0
        %1016 = vmatpush1.bf16.xpose.msra.mxu0 0
        %1017 = vmatprep.subr.bf16.mxu0 0
        %1018 = vmatpush1.bf16.xpose.msra.mxu0 0
        %1019 = vmatprep.subr.bf16.mxu0 0
        %1020 = vmatpush1.bf16.xpose.msra.mxu0 0
        %1021 = vmatprep.mubr.bf16.mxu0 0
        %1022 = vmatmul.mubr.bf16.gmra.mrb[0].mxu0 %v984
        %v1023 = vpop.f32.mrb[0].mxu0
        %v1024 = vadd.f32 0.0, %v1023
        %v1025 = vpop.f32.mrb[0].mxu0
        %v1026 = vpop.f32.mrb[0].mxu0
        %v1027 = vpop.f32.mrb[0].mxu0
        %1028 = vdwg.mxu0
        %v1029 = vsel %vm638, %v1024, -inf
        %1030 = vmax.xlane.f32.xlu0 %v1029
        %v1031 = vpop.xlane.xlu0 %1030
        %v1032 = vsub.f32 -inf, %v1031
        %v1033 = vmul.f32 %v1032, 1.442695
        %v1034 = vpow.pop %v1033
        %v1035 = vsub.f32 %v1024, %v1031
        %v1036 = vmul.f32 %v1035, 1.442695
        %v1037 = vpow.pop %v1036
        %v1038 = vmul.f32 %v1034, 0.0
        %v1039 = vsel %vm638, %v1037, 0.0
        %1040 = vadd.xlane.f32.xlu0 %v1039
        %v1041 = vpop.xlane.xlu0 %1040
        %v1042 = vadd.f32 %v1038, %v1041
        %v1043 = vpack.c.bf16 %v1037, %v1037
        %1044 = vrot.lane.b32.xlu0 %v637, 104
        %v1045 = vpop.permute.xlu0 %1044
        %v1047 = vsel %vm638, %v1043, 0
        %v1050 = vsel %vm703, %v1045, 0
        %1052 = vmatprep.subr.bf16.mxu0 0
        %1053 = vmatpush1.bf16.msra.mxu0 %v1050
        %1054 = vmatprep.subr.bf16.mxu0 0
        %1055 = vmatpush1.bf16.msra.mxu0 0
        %1056 = vmatprep.subr.bf16.mxu0 0
        %1057 = vmatpush1.bf16.msra.mxu0 0
        %1058 = vmatprep.subr.bf16.mxu0 0
        %1059 = vmatpush1.bf16.msra.mxu0 0
        %1060 = vmatprep.subr.bf16.mxu0 0
        %1061 = vmatpush1.bf16.msra.mxu0 0
        %1062 = vmatprep.subr.bf16.mxu0 0
        %1063 = vmatpush1.bf16.msra.mxu0 0
        %1064 = vmatprep.subr.bf16.mxu0 0
        %1065 = vmatpush1.bf16.msra.mxu0 0
        %1066 = vmatprep.subr.bf16.mxu0 0
        %1067 = vmatpush1.bf16.msra.mxu0 0
        %1068 = vmatprep.subr.bf16.mxu0 0
        %1069 = vmatpush1.bf16.msra.mxu0 0
        %1070 = vmatprep.subr.bf16.mxu0 0
        %1071 = vmatpush1.bf16.msra.mxu0 0
        %1072 = vmatprep.subr.bf16.mxu0 0
        %1073 = vmatpush1.bf16.msra.mxu0 0
        %1074 = vmatprep.subr.bf16.mxu0 0
        %1075 = vmatpush1.bf16.msra.mxu0 0
        %1076 = vmatprep.subr.bf16.mxu0 0
        %1077 = vmatpush1.bf16.msra.mxu0 0
        %1078 = vmatprep.subr.bf16.mxu0 0
        %1079 = vmatpush1.bf16.msra.mxu0 0
        %1080 = vmatprep.subr.bf16.mxu0 0
        %1081 = vmatpush1.bf16.msra.mxu0 0
        %1082 = vmatprep.subr.bf16.mxu0 0
        %1083 = vmatpush1.bf16.msra.mxu0 0
        %1084 = vmatprep.mubr.bf16.mxu0 0
        %1085 = vmatmul.mubr.bf16.gmra.mrb[0].mxu0 %v1047
        %v1086 = vpop.f32.mrb[0].mxu0
        %v1087 = vadd.f32 0.0, %v1086
        %v1088 = vpop.f32.mrb[0].mxu0
        %v1089 = vpop.f32.mrb[0].mxu0
        %v1090 = vpop.f32.mrb[0].mxu0
        %1091 = vdwg.mxu0
        %v1092 = vadd.f32 %v1038, %v1087
        %v1093 = vrcp.pop %v698
        %v1094 = vmul.f32 %v747, %v1093
        %1095 = vst.msk [vmem:[#allocation2] sm:$0xff] %vm638, %v1094
        %v1096 = vrcp.pop %v813
        %v1097 = vmul.f32 %v864, %v1096
        %1099 = vrot.lane.b32.xlu0 %v1097, 8
        %v1100 = vpop.permute.xlu0 %1099
        %vm1102 = vcmask 130112
        %1103 = vst.msk [vmem:[#allocation2] sm:$0xff] %vm1102, %v1100
        %v1104 = vrcp.pop %v928
        %v1105 = vmul.f32 %v978, %v1104
        %1107 = vrot.lane.b32.xlu0 %v1105, 16
        %v1108 = vpop.permute.xlu0 %1107
        %vm1110 = vcmask 195712
        %1111 = vst.msk [vmem:[#allocation2] sm:$0xff] %vm1110, %v1108
        %v1112 = vrcp.pop %v1042
        %v1113 = vmul.f32 %v1092, %v1112
        %1115 = vrot.lane.b32.xlu0 %v1113, 24
        %v1116 = vpop.permute.xlu0 %1115
        %vm1118 = vcmask 261312
        %1119 = vst.msk [vmem:[#allocation2] sm:$0xff] %vm1118, %v1116
        %v1120 = vld [vmem:[#allocation2] sm:$0xff]
        %v1121 = vpack.c.bf16 %v1120, %v1120
        %v1122 = vld [vmem:[#allocation11] sm:$0xff]
        %v1123 = vld [vmem:[#allocation11 + $0x8] sm:$0xff]
        %v1124 = vld [vmem:[#allocation11 + $0x10] sm:$0xff]
        %v1125 = vld [vmem:[#allocation11 + $0x18] sm:$0xff]
        %v1126 = vpack.c.bf16 %v1123, %v1122
        %v1127 = vpack.c.bf16 %v1125, %v1124
        %v1128 = vld [vmem:[%s9] sm:$0x1]
        %v1130 = vlaneseq
        %v1131 = vshrl.u32 %v1130, 7
        %v1132 = vsub.s32 0, %v1131
        %v1133 = vrot.slane %v1128, %v1132
        %vm1135 = vcmask 261120
        %v1137 = vsel %vm1135, %v1121, 0
        %1139 = vmatprep.subr.bf16.mxu0 0
        %1140 = vmatpush1.bf16.msra.mxu0 %v1126
        %1141 = vmatprep.subr.bf16.mxu0 0
        %1142 = vmatpush1.bf16.msra.mxu0 %v1127
        %1143 = vmatprep.subr.bf16.mxu0 0
        %1144 = vmatpush1.bf16.msra.mxu0 0
        %1145 = vmatprep.subr.bf16.mxu0 0
        %1146 = vmatpush1.bf16.msra.mxu0 0
        %1147 = vmatprep.subr.bf16.mxu0 0
        %1148 = vmatpush1.bf16.msra.mxu0 0
        %1149 = vmatprep.subr.bf16.mxu0 0
        %1150 = vmatpush1.bf16.msra.mxu0 0
        %1151 = vmatprep.subr.bf16.mxu0 0
        %1152 = vmatpush1.bf16.msra.mxu0 0
        %1153 = vmatprep.subr.bf16.mxu0 0
        %1154 = vmatpush1.bf16.msra.mxu0 0
        %1155 = vmatprep.subr.bf16.mxu0 0
        %1156 = vmatpush1.bf16.msra.mxu0 0
        %1157 = vmatprep.subr.bf16.mxu0 0
        %1158 = vmatpush1.bf16.msra.mxu0 0
        %1159 = vmatprep.subr.bf16.mxu0 0
        %1160 = vmatpush1.bf16.msra.mxu0 0
        %1161 = vmatprep.subr.bf16.mxu0 0
        %1162 = vmatpush1.bf16.msra.mxu0 0
        %1163 = vmatprep.subr.bf16.mxu0 0
        %1164 = vmatpush1.bf16.msra.mxu0 0
        %1165 = vmatprep.subr.bf16.mxu0 0
        %1166 = vmatpush1.bf16.msra.mxu0 0
        %1167 = vmatprep.subr.bf16.mxu0 0
        %1168 = vmatpush1.bf16.msra.mxu0 0
        %1169 = vmatprep.subr.bf16.mxu0 0
        %1170 = vmatpush1.bf16.msra.mxu0 0
        %1171 = vmatprep.mubr.bf16.mxu0 0
        %1172 = vmatmul.mubr.bf16.gmra.mrb[0].mxu0 %v1137
        %v1173 = vpop.f32.mrb[0].mxu0
        %v1174 = vadd.f32 %v1133, %v1173
        %v1175 = vpop.f32.mrb[0].mxu0
        %v1176 = vpop.f32.mrb[0].mxu0
        %v1177 = vpop.f32.mrb[0].mxu0
        %1178 = vdwg.mxu0
        %1179 = vst.msk [vmem:[%s471] sm:$0xff] %vm1135, %v1174
        %s1180 = sand.u32 %s275, 1
        %s1181 = scalar_lea.sflag [#allocation5], %s1180
        %s1182 = sand.u32 %s275, 1
        %s1183 = smul.addr %s1182, 8
        %s1184 = scalar_lea.vmem [#allocation12], %s1183
        // Predicated region
        $region81: #{tpu_custom_call.1} parent=59 // pred_check
          %p1185 = pneg %p285
        $region82: #{tpu_custom_call.1} parent=59 // pred_check_branch
          %1187 = sbr.rel (%p1185) target = $region84
        $region83: #{tpu_custom_call.1} parent=59 // pred_region
          %s1189 = ssub.s32 128, 128
          %1190 = vsyncadd %s1181, %s1189
          %s1191 = sadd.s32 %s36, %s35
          %s1192 = smul.addr %s1191, 128
          %s1193 = scalar_lea.hbm %s10, %s1192
          %s1195 = sshll.u32 %s1184, 4
          %s1196 = int_to_ptr.vmem [resolvable:$true] %s1195
          %1198 = dma.vmem_to_hbm [thread:$0]  %s1196, 128, %s1193, %s1181
        $region84: #{tpu_custom_call.1} parent=59 // pred_fallthru
          _
      $region60: #{tpu_custom_call.1} parent=5 // pred_fallthru
        _
      %p1199 = scmp.le.s32.totalorder 2, %s26
      // Predicated region
      $region85: #{tpu_custom_call.1} parent=5 // pred_check
        %p1200 = pneg %p1199
      $region86: #{tpu_custom_call.1} parent=5 // pred_check_branch
        %1202 = sbr.rel (%p1200) target = $region88
      $region87: #{tpu_custom_call.1} parent=5 // pred_region
        %s1203 = ssub.s32 %s26, 2
        // Predicated region
        $region89: #{tpu_custom_call.1} parent=87 // pred_check
          %p1204 = pneg %p291
        $region90: #{tpu_custom_call.1} parent=87 // pred_check_branch
          %1206 = sbr.rel (%p1204) target = $region92
        $region91: #{tpu_custom_call.1} parent=87 // pred_region
          %s1207 = sand.u32 %s276, 1
          %s1208 = scalar_lea.sflag [#allocation5], %s1207
          %s1209 = sand.u32 %s276, 1
          %s1210 = smul.addr %s1209, 8
          %s1211 = scalar_lea.vmem [#allocation12], %s1210
          %1212 = dma.done %s1208, 128
        $region92: #{tpu_custom_call.1} parent=87 // pred_fallthru
          _
      $region88: #{tpu_custom_call.1} parent=5 // pred_fallthru
        _
    $region6: #{tpu_custom_call.1} parent=1 // loop_footer
      %s30 = sadd.s32 1, %s26
    $region7: #{tpu_custom_call.1} parent=1 // loop_footer_branch
      %25 = sbr.rel target = $region3
    $region8: #{tpu_custom_call.1} parent=1 // loop_exit
      _
    %1213 = vsyncpa [#allocation4], 1
    %s1214 = scalar_lea.sflag [#allocation4], 1
    %1215 = vsyncpa %s1214, 1
    %1216 = vsyncpa [#allocation7], 1
    %s1217 = scalar_lea.sflag [#allocation7], 1
    %1218 = vsyncpa %s1217, 1
    %1219 = vsyncpa [#allocation10], 1
    %1220 = vsyncpa [#allocation5], 1
    %s1221 = scalar_lea.sflag [#allocation5], 1
    %1222 = vsyncpa %s1221, 1

</llo_original>
